<compile_context>
chip_gen: v7x
topology: tpu7x:2x2x1
jax: 0.10.0
libtpu: 0.0.40
codegen_flags: <defaults>
</compile_context>

<pallas_src>
import numpy as np
import jax
import jax.numpy as jnp
from jax.experimental import pallas as pl
from jax.experimental.pallas import tpu as pltpu

N_AGENTS = 3          # args.n_agents (module hardcodes 3 in the distance loop)
H = 32                # args.rnn_hidden_dim
A = 32                # args.n_attention
OBS_FEAT = 42         # input_shape - n_agents (module hardcodes 42)
BATCH = 1             # module effectively assumes batch 1 (obs.reshape(3, -1))
SIZE = BATCH * N_AGENTS
L = N_AGENTS - 1
TAU = 0.01

H3 = 3 * H            # 96
H6 = 6 * H            # 192

# ---- coalesced weight-slab layout (everything 8-aligned sublane start and
#      0 / 128 / 256 lane start, so no in-kernel rotates on the matmul path) --
_R_BIG = 0    # rows   0: 32, lanes 0:448  -> [W_left | w_q/sqrt(A) | w_k | W_right]
_R_BLK = 32   # rows  32: 96, lanes 0:192  -> blockdiag(W_ih, W_hh)        (GRUCell)
              #               lanes 256:448 -> blockdiag(W_hh_f, W_hh_r)   (bi-GRU hh)
_R_MISC = 96  # rows  96:138, lanes 0:32   -> w_enc
              # rows  96:160, lanes 128:129-> w_hd  (= w_he[:,1] - w_he[:,0])
              # rows  96:102, lanes 256:259-> P_sel (pair-partner selection matrix)
_R_BIAS = 160 # one bias per row, lane 0:  b_enc / b_cell / b_bi_in / b_bi_hh / b_hd
_W_ROWS = 168
_W_COLS = 448

# output slab: rows 0..SIZE-1 used; cols [0:H]=h_out, [H:H+L]=xx, [H+L:H+2L]=res
_OUT_ROWS, _OUT_COLS = 8, 128

_VMEM = pl.BlockSpec(memory_space=pltpu.MemorySpace.VMEM)


def _gru_gates(gi, gh, h):
    """PyTorch GRU gate math (r, z, n order). r|z share ONE fused sigmoid pass."""
    rz = jax.nn.sigmoid(gi[:, :2 * H] + gh[:, :2 * H])
    r, z = rz[:, :H], rz[:, H:]
    n = jnp.tanh(gi[:, 2 * H:] + r * gh[:, 2 * H:])
    return (1.0 - z) * n + z * h


# --------------------------------------------------------------------------- kernel
def g2a_kernel(obs_ref, hin_ref, noise_ref, w_ref, out_ref):
    obs = obs_ref[...]                                   # (SIZE, OBS_FEAT)
    h_in = hin_ref[...]                                  # (SIZE, H)
    noise = noise_ref[...]                               # (L*SIZE, 1)  g1-g0, time-major

    # ---- aligned static views of the single weight slab -------------------
    w_big = w_ref[_R_BIG:_R_BIG + H, :]                  # (32, 448)
    w_cell = w_ref[_R_BLK:_R_BLK + 2 * H, 0:H6]          # (64, 192)
    w_bihh = w_ref[_R_BLK:_R_BLK + 2 * H, 256:256 + H6]  # (64, 192)
    w_enc = w_ref[_R_MISC:_R_MISC + OBS_FEAT, 0:H]       # (42, 32)
    w_hd = w_ref[_R_MISC:_R_MISC + 2 * H, 128:129]       # (64, 1)
    psel = w_ref[_R_MISC:_R_MISC + L * SIZE, 256:256 + SIZE]   # (6, 3)
    b_enc = w_ref[_R_BIAS + 0:_R_BIAS + 1, 0:H]
    b_cell = w_ref[_R_BIAS + 1:_R_BIAS + 2, 0:H6]
    b_biin = w_ref[_R_BIAS + 2:_R_BIAS + 3, 0:H6]
    b_bihh = w_ref[_R_BIAS + 3:_R_BIAS + 4, 0:H6]
    b_hd = w_ref[_R_BIAS + 4:_R_BIAS + 5, 0:1]

    # 1) encoding Linear + ReLU, then GRUCell via one block-diagonal matmul
    #    (keeps gi / gh separate for the n-gate).
    x = jnp.maximum(
        jnp.dot(obs, w_enc, preferred_element_type=jnp.float32) + b_enc, 0.0)
    g = jnp.dot(jnp.concatenate([x, h_in], 1), w_cell,
                preferred_element_type=jnp.float32) + b_cell          # (3, 192)
    h_out = _gru_gates(g[:, :H3], g[:, H3:], h_in)                    # (3, H)

    # 2) ONE matmul: bi-GRU input-side gates for both pair halves & both
    #    directions, with the q|k projection fused as extra output columns.
    glr = jnp.dot(h_out, w_big, preferred_element_type=jnp.float32)   # (3, 448)
    gl = glr[:, 0:H6]                  # own-agent half of each pair input
    qk = glr[:, H6:H6 + 2 * A]         # fused q|k (off the serial path)
    gr = glr[:, 256:256 + H6]          # partner-agent half (lane-tile aligned)

    #    pair construction ( t=0: (0,1)(1,0)(2,0); t=1: (0,2)(1,2)(2,1) ) via a
    #    baked 0/1 selection matmul instead of row-concat soup; rows time-major.
    gi_all = (jnp.concatenate([gl, gl], 0)
              + jnp.dot(psel, gr, preferred_element_type=jnp.float32)
              + b_biin)                                               # (6, 192)
    gi_f, gi_r = gi_all[:, :H3], gi_all[:, H3:]

    # 3) bidirectional GRU: 2 steps, fully unrolled, one block-diag matmul per
    #    step covering fwd+bwd hidden-side gates.
    hf = jnp.zeros((SIZE, H), jnp.float32)
    hb = jnp.zeros((SIZE, H), jnp.float32)
    fwd = [None] * L
    bwd = [None] * L
    for s in range(L):
        tf, tb = s, L - 1 - s
        gh = jnp.dot(jnp.concatenate([hf, hb], 1), w_bihh,
                     preferred_element_type=jnp.float32) + b_bihh     # (3, 192)
        hf = _gru_gates(gi_f[tf * SIZE:(tf + 1) * SIZE], gh[:, :H3], hf)
        hb = _gru_gates(gi_r[tb * SIZE:(tb + 1) * SIZE], gh[:, H3:], hb)
        fwd[tf] = hf
        bwd[tb] = hb

    # 4) hard_encoding + 2-class gumbel_softmax in TIME-MAJOR order (3 concats
    #    total); the permute(1,0,2) is absorbed into the hard32 indexing.
    #    softmax((l+g)/tau)[:,1] == sigmoid(((l1+g1)-(l0+g0))/tau).
    hh_tm = jnp.concatenate([jnp.concatenate([fwd[0], fwd[1]], 0),
                             jnp.concatenate([bwd[0], bwd[1]], 0)], 1)  # (6, 2H)
    ldiff = jnp.dot(hh_tm, w_hd, preferred_element_type=jnp.float32) + b_hd
    hard_p1 = jax.nn.sigmoid((ldiff + noise) * (1.0 / TAU))             # (6, 1)
    hard32 = jnp.concatenate([hard_p1[0:SIZE], hard_p1[SIZE:2 * SIZE]], 1)  # (3, 2)

    # 5) soft attention: fused q|k already computed; scores without transpose;
    #    off-diagonal gather reuses P_sel as a mask (mask + lane-reduce).
    q, k = qk[:, :A], qk[:, A:]
    scores = jax.lax.dot_general(q, k, (((1,), (1,)), ((), ())),
                                 preferred_element_type=jnp.float32)    # (3, 3)
    ri = jax.lax.broadcasted_iota(jnp.int32, (N_AGENTS, N_AGENTS), 0)
    ci = jax.lax.broadcasted_iota(jnp.int32, (N_AGENTS, N_AGENTS), 1)
    masked = jnp.where(ri == ci, jnp.float32(-1e30), scores)            # exclude self
    e = jnp.exp(masked - jnp.max(masked, axis=-1, keepdims=True))
    soft = e / jnp.sum(e, axis=-1, keepdims=True)
    soft_c0 = jnp.sum(soft * psel[0:SIZE, :], axis=-1, keepdims=True)   # j = first non-i
    soft_c1 = jnp.sum(soft * psel[SIZE:2 * SIZE, :], axis=-1, keepdims=True)
    xx = jnp.concatenate([soft_c0, soft_c1], 1) * hard32                # (3, 2)

    # 6) pairwise squared distances over the 42 obs features (one reduce pass).
    o0, o1, o2 = obs[0:1], obs[1:2], obs[2:3]
    diffs = jnp.concatenate([o0 - o1, o0 - o2, o1 - o2], 0)             # (3, 42)
    d = jnp.sum(diffs * diffs, axis=-1, keepdims=True)                  # d01 d02 d12
    res = jnp.concatenate([jnp.concatenate([d[0:1], d[1:2]], 1),
                           jnp.concatenate([d[0:1], d[2:3]], 1),
                           jnp.concatenate([d[1:2], d[2:3]], 1)], 0)    # (3, 2)

    # 7) single lane-dense output slab (one unmasked-width store).
    slab = jnp.concatenate(
        [h_out, xx, res,
         jnp.zeros((SIZE, _OUT_COLS - (H + 2 * L)), jnp.float32)], 1)
    out_ref[...] = jnp.concatenate(
        [slab, jnp.zeros((_OUT_ROWS - SIZE, _OUT_COLS), jnp.float32)], 0)


# --------------------------------------------------------------------------- wrapper
def g2a_forward(w_all, obs, hidden_state, key):
    h_in = hidden_state.reshape(-1, H)
    # Fresh Gumbel noise per call (matches F.gumbel_softmax drawing new noise
    # every forward); drawn outside the kernel because the in-kernel TPU PRNG
    # has no interpret/CPU lowering.  Rows are time-major (t*SIZE + agent).
    gmb = jax.random.gumbel(key, (L * SIZE, 2), jnp.float32)
    noise = gmb[:, 1:2] - gmb[:, 0:1]                                  # (6, 1)
    out = pl.pallas_call(
        g2a_kernel,
        out_shape=jax.ShapeDtypeStruct((_OUT_ROWS, _OUT_COLS), jnp.float32),
        in_specs=[_VMEM, _VMEM, _VMEM, _VMEM],
        out_specs=_VMEM,
    )(obs, h_in, noise, w_all)
    h_out = out[:SIZE, :H]
    xx = out[:SIZE, H:H + L]
    res_arr = out[:SIZE, H + L:H + 2 * L]
    return h_out, xx, res_arr


def compute_flag(res_arr):
    """Host-side replica of the original argmax / duplicate-pair bookkeeping."""
    res_arr = np.asarray(res_arr)
    temp = []
    for i in range(len(res_arr)):
        j = int(np.argmax(res_arr[i]))
        if res_arr[i][j] != 0:
            if j >= i:
                j += 1
        t = [i, j]
        t.sort()
        temp.append(t)
    flag = 0
    for i in range(len(temp)):
        for j in range(len(temp)):
            if j > i:
                if temp[i] == temp[j]:
                    flag = temp[i]
                    break
    return flag


# --------------------------------------------------------------------------- params
def init_params(key):
    ks = jax.random.split(key, 18)

    def lin(k, fan_in, shape):
        b = 1.0 / np.sqrt(fan_in)
        return jax.random.uniform(k, shape, jnp.float32, -b, b)

    return dict(
        # encoding: Linear(OBS_FEAT -> H)
        w_enc=lin(ks[0], OBS_FEAT, (OBS_FEAT, H)),
        b_enc=lin(ks[1], OBS_FEAT, (1, H)),
        # GRUCell(H, H)  (gate order r,z,n; stored transposed: x @ W)
        w_ih=lin(ks[2], H, (H, 3 * H)),
        w_hh=lin(ks[3], H, (H, 3 * H)),
        b_ih=lin(ks[4], H, (1, 3 * H)),
        b_hh=lin(ks[5], H, (1, 3 * H)),
        # bidirectional GRU(2H -> H)
        w_ih_f=lin(ks[6], H, (2 * H, 3 * H)),
        w_hh_f=lin(ks[7], H, (H, 3 * H)),
        b_ih_f=lin(ks[8], H, (1, 3 * H)),
        b_hh_f=lin(ks[9], H, (1, 3 * H)),
        w_ih_r=lin(ks[10], H, (2 * H, 3 * H)),
        w_hh_r=lin(ks[11], H, (H, 3 * H)),
        b_ih_r=lin(ks[12], H, (1, 3 * H)),
        b_hh_r=lin(ks[13], H, (1, 3 * H)),
        # hard_encoding: Linear(2H -> 2)
        w_he=lin(ks[14], 2 * H, (2 * H, 2)),
        b_he=lin(ks[15], 2 * H, (1, 2)),
        # q / k projections (bias-free)
        w_q=lin(ks[16], H, (H, A)),
        w_k=lin(ks[17], H, (H, A)),
        # TODO(synk): self.v (Linear(H->A)) is defined in __init__ but never
        # used in forward(), so it is intentionally omitted here.
    )


def pack_params(p):
    """Fold/pack every weight & bias into ONE aligned f32 slab (host-side, once)."""
    pn = {k: np.asarray(v, np.float32) for k, v in p.items()}
    w = np.zeros((_W_ROWS, _W_COLS), np.float32)

    # W_big (rows 0:32): [W_left | w_q/sqrt(A) | w_k | W_right]
    w[_R_BIG:_R_BIG + H, 0:H3] = pn['w_ih_f'][:H]
    w[_R_BIG:_R_BIG + H, H3:H6] = pn['w_ih_r'][:H]
    w[_R_BIG:_R_BIG + H, H6:H6 + A] = pn['w_q'] / np.sqrt(A)
    w[_R_BIG:_R_BIG + H, H6 + A:H6 + 2 * A] = pn['w_k']
    w[_R_BIG:_R_BIG + H, 256:256 + H3] = pn['w_ih_f'][H:]
    w[_R_BIG:_R_BIG + H, 256 + H3:256 + H6] = pn['w_ih_r'][H:]

    # GRUCell block-diag (rows 32:96, lanes 0:192)
    w[_R_BLK:_R_BLK + H, 0:H3] = pn['w_ih']
    w[_R_BLK + H:_R_BLK + 2 * H, H3:H6] = pn['w_hh']
    # bi-GRU hidden-gate block-diag (rows 32:96, lanes 256:448)
    w[_R_BLK:_R_BLK + H, 256:256 + H3] = pn['w_hh_f']
    w[_R_BLK + H:_R_BLK + 2 * H, 256 + H3:256 + H6] = pn['w_hh_r']

    # misc block (rows 96:160)
    w[_R_MISC:_R_MISC + OBS_FEAT, 0:H] = pn['w_enc']
    w[_R_MISC:_R_MISC + 2 * H, 128:129] = pn['w_he'][:, 1:2] - pn['w_he'][:, 0:1]
    partner = [1, 0, 0, 2, 2, 1]          # pair partner of row (t*SIZE + agent)
    for row, j in enumerate(partner):
        w[_R_MISC + row, 256 + j] = 1.0

    # biases: one per row, starting at lane 0
    w[_R_BIAS + 0, 0:H] = pn['b_enc'][0]
    w[_R_BIAS + 1, 0:H6] = np.concatenate([pn['b_ih'][0], pn['b_hh'][0]])
    w[_R_BIAS + 2, 0:H6] = np.concatenate([pn['b_ih_f'][0], pn['b_ih_r'][0]])
    w[_R_BIAS + 3, 0:H6] = np.concatenate([pn['b_hh_f'][0], pn['b_hh_r'][0]])
    w[_R_BIAS + 4, 0:1] = pn['b_he'][0, 1:2] - pn['b_he'][0, 0:1]
    return jnp.asarray(w)


if __name__ == "__main__":
    key = jax.random.PRNGKey(0)
    k_par, k_obs, k_gum = jax.random.split(key, 3)

    params = init_params(k_par)
    w_all = pack_params(params)                                    # (168, 448)

    obs = jax.random.normal(k_obs, (SIZE, OBS_FEAT), jnp.float32)  # (3, 42)
    hidden_state = jnp.zeros((N_AGENTS, H), jnp.float32)           # init_hidden()

    fwd = jax.jit(g2a_forward)
    h_out, xx, res_arr = fwd(w_all, obs, hidden_state, k_gum)
    jax.block_until_ready((h_out, xx, res_arr))
    flag = compute_flag(res_arr)

    assert h_out.shape == (SIZE, H)
    assert xx.shape == (N_AGENTS, N_AGENTS - 1)
    assert res_arr.shape == (N_AGENTS, N_AGENTS - 1)
    assert bool(np.all(np.isfinite(np.asarray(h_out))))
    assert bool(np.all(np.isfinite(np.asarray(xx))))
    assert bool(np.all(np.asarray(res_arr) >= 0.0))
    assert flag == 0 or (isinstance(flag, list) and len(flag) == 2)
    print("KERNEL_OK")
</pallas_src>

<mosaic_0001>
module attributes {stable_mosaic.version = 11 : i64} {
  func.func @g2a_kernel(%arg0: memref<3x42xf32, #tpu.memory_space<vmem>>, %arg1: memref<3x32xf32, #tpu.memory_space<vmem>>, %arg2: memref<6x1xf32, #tpu.memory_space<vmem>>, %arg3: memref<168x448xf32, #tpu.memory_space<vmem>>, %arg4: memref<8x128xf32, #tpu.memory_space<vmem>>) attributes {dimension_semantics = [], scalar_prefetch = 0 : i64, scratch_operands = 0 : i64, tpu.core_type = #tpu.core_type<tc>} {
    %c0 = arith.constant 0 : index
    %c0_0 = arith.constant 0 : index
    %0 = vector.load %arg0[%c0, %c0_0] : memref<3x42xf32, #tpu.memory_space<vmem>>, vector<3x42xf32>
    %c0_1 = arith.constant 0 : index
    %c0_2 = arith.constant 0 : index
    %1 = vector.load %arg1[%c0_1, %c0_2] : memref<3x32xf32, #tpu.memory_space<vmem>>, vector<3x32xf32>
    %c0_3 = arith.constant 0 : index
    %c0_4 = arith.constant 0 : index
    %2 = vector.load %arg2[%c0_3, %c0_4] : memref<6x1xf32, #tpu.memory_space<vmem>>, vector<6x1xf32>
    %c0_5 = arith.constant 0 : index
    %c0_6 = arith.constant 0 : index
    %3 = vector.load %arg3[%c0_5, %c0_6] : memref<168x448xf32, #tpu.memory_space<vmem>>, vector<32x448xf32>
    %c32 = arith.constant 32 : index
    %c0_7 = arith.constant 0 : index
    %4 = vector.load %arg3[%c32, %c0_7] : memref<168x448xf32, #tpu.memory_space<vmem>>, vector<64x192xf32>
    %c32_8 = arith.constant 32 : index
    %c256 = arith.constant 256 : index
    %5 = vector.load %arg3[%c32_8, %c256] : memref<168x448xf32, #tpu.memory_space<vmem>>, vector<64x192xf32>
    %c96 = arith.constant 96 : index
    %c0_9 = arith.constant 0 : index
    %6 = vector.load %arg3[%c96, %c0_9] : memref<168x448xf32, #tpu.memory_space<vmem>>, vector<42x32xf32>
    %c96_10 = arith.constant 96 : index
    %c128 = arith.constant 128 : index
    %7 = vector.load %arg3[%c96_10, %c128] : memref<168x448xf32, #tpu.memory_space<vmem>>, vector<64x1xf32>
    %c96_11 = arith.constant 96 : index
    %c256_12 = arith.constant 256 : index
    %8 = vector.load %arg3[%c96_11, %c256_12] : memref<168x448xf32, #tpu.memory_space<vmem>>, vector<6x3xf32>
    %c160 = arith.constant 160 : index
    %c0_13 = arith.constant 0 : index
    %9 = vector.load %arg3[%c160, %c0_13] : memref<168x448xf32, #tpu.memory_space<vmem>>, vector<1x32xf32>
    %c161 = arith.constant 161 : index
    %c0_14 = arith.constant 0 : index
    %10 = vector.load %arg3[%c161, %c0_14] : memref<168x448xf32, #tpu.memory_space<vmem>>, vector<1x192xf32>
    %c162 = arith.constant 162 : index
    %c0_15 = arith.constant 0 : index
    %11 = vector.load %arg3[%c162, %c0_15] : memref<168x448xf32, #tpu.memory_space<vmem>>, vector<1x192xf32>
    %c163 = arith.constant 163 : index
    %c0_16 = arith.constant 0 : index
    %12 = vector.load %arg3[%c163, %c0_16] : memref<168x448xf32, #tpu.memory_space<vmem>>, vector<1x192xf32>
    %c164 = arith.constant 164 : index
    %c0_17 = arith.constant 0 : index
    %13 = vector.load %arg3[%c164, %c0_17] : memref<168x448xf32, #tpu.memory_space<vmem>>, vector<1x1xf32>
    %cst = arith.constant dense<0.000000e+00> : vector<3x32xf32>
    %14 = tpu.matmul %0, %6, %cst {dimension_numbers = #tpu.dot_dimension_numbers<[1], [0], [0], [1], [0, 0, 1, 1], [], []>} : vector<3x42xf32>, vector<42x32xf32>, vector<3x32xf32> -> vector<3x32xf32>
    %15 = vector.broadcast %9 : vector<1x32xf32> to vector<3x32xf32>
    %16 = arith.addf %14, %15 : vector<3x32xf32>
    %cst_18 = arith.constant 0.000000e+00 : f32
    %17 = vector.broadcast %cst_18 : f32 to vector<3x32xf32>
    %18 = arith.maximumf %16, %17 : vector<3x32xf32>
    %19 = tpu.concatenate %18, %1 in 1 : vector<3x32xf32>, vector<3x32xf32> -> vector<3x64xf32>
    %cst_19 = arith.constant dense<0.000000e+00> : vector<3x192xf32>
    %20 = tpu.matmul %19, %4, %cst_19 {dimension_numbers = #tpu.dot_dimension_numbers<[1], [0], [0], [1], [0, 0, 1, 1], [], []>} : vector<3x64xf32>, vector<64x192xf32>, vector<3x192xf32> -> vector<3x192xf32>
    %21 = vector.broadcast %10 : vector<1x192xf32> to vector<3x192xf32>
    %22 = arith.addf %20, %21 : vector<3x192xf32>
    %23 = vector.extract_strided_slice %22 {offsets = [0, 0], sizes = [3, 96], strides = [1, 1]} : vector<3x192xf32> to vector<3x96xf32>
    %24 = vector.extract_strided_slice %22 {offsets = [0, 96], sizes = [3, 96], strides = [1, 1]} : vector<3x192xf32> to vector<3x96xf32>
    %25 = vector.extract_strided_slice %23 {offsets = [0, 0], sizes = [3, 64], strides = [1, 1]} : vector<3x96xf32> to vector<3x64xf32>
    %26 = vector.extract_strided_slice %24 {offsets = [0, 0], sizes = [3, 64], strides = [1, 1]} : vector<3x96xf32> to vector<3x64xf32>
    %27 = arith.addf %25, %26 : vector<3x64xf32>
    %28 = arith.negf %27 : vector<3x64xf32>
    %29 = math.exp %28 : vector<3x64xf32>
    %cst_20 = arith.constant 1.000000e+00 : f32
    %30 = vector.broadcast %cst_20 : f32 to vector<3x64xf32>
    %31 = arith.addf %30, %29 : vector<3x64xf32>
    %32 = arith.divf %30, %31 : vector<3x64xf32>
    %33 = vector.extract_strided_slice %32 {offsets = [0, 0], sizes = [3, 32], strides = [1, 1]} : vector<3x64xf32> to vector<3x32xf32>
    %34 = vector.extract_strided_slice %32 {offsets = [0, 32], sizes = [3, 32], strides = [1, 1]} : vector<3x64xf32> to vector<3x32xf32>
    %35 = vector.extract_strided_slice %23 {offsets = [0, 64], sizes = [3, 32], strides = [1, 1]} : vector<3x96xf32> to vector<3x32xf32>
    %36 = vector.extract_strided_slice %24 {offsets = [0, 64], sizes = [3, 32], strides = [1, 1]} : vector<3x96xf32> to vector<3x32xf32>
    %37 = arith.mulf %33, %36 : vector<3x32xf32>
    %38 = arith.addf %35, %37 : vector<3x32xf32>
    %39 = math.tanh %38 : vector<3x32xf32>
    %cst_21 = arith.constant 1.000000e+00 : f32
    %40 = vector.broadcast %cst_21 : f32 to vector<3x32xf32>
    %41 = arith.subf %40, %34 : vector<3x32xf32>
    %42 = arith.mulf %41, %39 : vector<3x32xf32>
    %43 = arith.mulf %34, %1 : vector<3x32xf32>
    %44 = arith.addf %42, %43 : vector<3x32xf32>
    %cst_22 = arith.constant dense<0.000000e+00> : vector<3x448xf32>
    %45 = tpu.matmul %44, %3, %cst_22 {dimension_numbers = #tpu.dot_dimension_numbers<[1], [0], [0], [1], [0, 0, 1, 1], [], []>} : vector<3x32xf32>, vector<32x448xf32>, vector<3x448xf32> -> vector<3x448xf32>
    %46 = vector.extract_strided_slice %45 {offsets = [0, 0], sizes = [3, 192], strides = [1, 1]} : vector<3x448xf32> to vector<3x192xf32>
    %47 = vector.extract_strided_slice %45 {offsets = [0, 192], sizes = [3, 64], strides = [1, 1]} : vector<3x448xf32> to vector<3x64xf32>
    %48 = vector.extract_strided_slice %45 {offsets = [0, 256], sizes = [3, 192], strides = [1, 1]} : vector<3x448xf32> to vector<3x192xf32>
    %49 = tpu.concatenate %46, %46 in 0 : vector<3x192xf32>, vector<3x192xf32> -> vector<6x192xf32>
    %cst_23 = arith.constant dense<0.000000e+00> : vector<6x192xf32>
    %50 = tpu.matmul %8, %48, %cst_23 {dimension_numbers = #tpu.dot_dimension_numbers<[1], [0], [0], [1], [0, 0, 1, 1], [], []>} : vector<6x3xf32>, vector<3x192xf32>, vector<6x192xf32> -> vector<6x192xf32>
    %51 = arith.addf %49, %50 : vector<6x192xf32>
    %52 = vector.broadcast %11 : vector<1x192xf32> to vector<6x192xf32>
    %53 = arith.addf %51, %52 : vector<6x192xf32>
    %54 = vector.extract_strided_slice %53 {offsets = [0, 0], sizes = [6, 96], strides = [1, 1]} : vector<6x192xf32> to vector<6x96xf32>
    %55 = vector.extract_strided_slice %53 {offsets = [0, 96], sizes = [6, 96], strides = [1, 1]} : vector<6x192xf32> to vector<6x96xf32>
    %cst_24 = arith.constant 0.000000e+00 : f32
    %56 = vector.broadcast %cst_24 : f32 to vector<3x32xf32>
    %cst_25 = arith.constant 0.000000e+00 : f32
    %57 = vector.broadcast %cst_25 : f32 to vector<3x32xf32>
    %58 = tpu.concatenate %56, %57 in 1 : vector<3x32xf32>, vector<3x32xf32> -> vector<3x64xf32>
    %cst_26 = arith.constant dense<0.000000e+00> : vector<3x192xf32>
    %59 = tpu.matmul %58, %5, %cst_26 {dimension_numbers = #tpu.dot_dimension_numbers<[1], [0], [0], [1], [0, 0, 1, 1], [], []>} : vector<3x64xf32>, vector<64x192xf32>, vector<3x192xf32> -> vector<3x192xf32>
    %60 = vector.broadcast %12 : vector<1x192xf32> to vector<3x192xf32>
    %61 = arith.addf %59, %60 : vector<3x192xf32>
    %62 = vector.extract_strided_slice %54 {offsets = [0, 0], sizes = [3, 96], strides = [1, 1]} : vector<6x96xf32> to vector<3x96xf32>
    %63 = vector.extract_strided_slice %61 {offsets = [0, 0], sizes = [3, 96], strides = [1, 1]} : vector<3x192xf32> to vector<3x96xf32>
    %64 = vector.extract_strided_slice %62 {offsets = [0, 0], sizes = [3, 64], strides = [1, 1]} : vector<3x96xf32> to vector<3x64xf32>
    %65 = vector.extract_strided_slice %63 {offsets = [0, 0], sizes = [3, 64], strides = [1, 1]} : vector<3x96xf32> to vector<3x64xf32>
    %66 = arith.addf %64, %65 : vector<3x64xf32>
    %67 = arith.negf %66 : vector<3x64xf32>
    %68 = math.exp %67 : vector<3x64xf32>
    %cst_27 = arith.constant 1.000000e+00 : f32
    %69 = vector.broadcast %cst_27 : f32 to vector<3x64xf32>
    %70 = arith.addf %69, %68 : vector<3x64xf32>
    %71 = arith.divf %69, %70 : vector<3x64xf32>
    %72 = vector.extract_strided_slice %71 {offsets = [0, 0], sizes = [3, 32], strides = [1, 1]} : vector<3x64xf32> to vector<3x32xf32>
    %73 = vector.extract_strided_slice %71 {offsets = [0, 32], sizes = [3, 32], strides = [1, 1]} : vector<3x64xf32> to vector<3x32xf32>
    %74 = vector.extract_strided_slice %62 {offsets = [0, 64], sizes = [3, 32], strides = [1, 1]} : vector<3x96xf32> to vector<3x32xf32>
    %75 = vector.extract_strided_slice %63 {offsets = [0, 64], sizes = [3, 32], strides = [1, 1]} : vector<3x96xf32> to vector<3x32xf32>
    %76 = arith.mulf %72, %75 : vector<3x32xf32>
    %77 = arith.addf %74, %76 : vector<3x32xf32>
    %78 = math.tanh %77 : vector<3x32xf32>
    %cst_28 = arith.constant 1.000000e+00 : f32
    %79 = vector.broadcast %cst_28 : f32 to vector<3x32xf32>
    %80 = arith.subf %79, %73 : vector<3x32xf32>
    %81 = arith.mulf %80, %78 : vector<3x32xf32>
    %82 = arith.mulf %73, %56 : vector<3x32xf32>
    %83 = arith.addf %81, %82 : vector<3x32xf32>
    %84 = vector.extract_strided_slice %55 {offsets = [3, 0], sizes = [3, 96], strides = [1, 1]} : vector<6x96xf32> to vector<3x96xf32>
    %85 = vector.extract_strided_slice %61 {offsets = [0, 96], sizes = [3, 96], strides = [1, 1]} : vector<3x192xf32> to vector<3x96xf32>
    %86 = vector.extract_strided_slice %84 {offsets = [0, 0], sizes = [3, 64], strides = [1, 1]} : vector<3x96xf32> to vector<3x64xf32>
    %87 = vector.extract_strided_slice %85 {offsets = [0, 0], sizes = [3, 64], strides = [1, 1]} : vector<3x96xf32> to vector<3x64xf32>
    %88 = arith.addf %86, %87 : vector<3x64xf32>
    %89 = arith.negf %88 : vector<3x64xf32>
    %90 = math.exp %89 : vector<3x64xf32>
    %cst_29 = arith.constant 1.000000e+00 : f32
    %91 = vector.broadcast %cst_29 : f32 to vector<3x64xf32>
    %92 = arith.addf %91, %90 : vector<3x64xf32>
    %93 = arith.divf %91, %92 : vector<3x64xf32>
    %94 = vector.extract_strided_slice %93 {offsets = [0, 0], sizes = [3, 32], strides = [1, 1]} : vector<3x64xf32> to vector<3x32xf32>
    %95 = vector.extract_strided_slice %93 {offsets = [0, 32], sizes = [3, 32], strides = [1, 1]} : vector<3x64xf32> to vector<3x32xf32>
    %96 = vector.extract_strided_slice %84 {offsets = [0, 64], sizes = [3, 32], strides = [1, 1]} : vector<3x96xf32> to vector<3x32xf32>
    %97 = vector.extract_strided_slice %85 {offsets = [0, 64], sizes = [3, 32], strides = [1, 1]} : vector<3x96xf32> to vector<3x32xf32>
    %98 = arith.mulf %94, %97 : vector<3x32xf32>
    %99 = arith.addf %96, %98 : vector<3x32xf32>
    %100 = math.tanh %99 : vector<3x32xf32>
    %cst_30 = arith.constant 1.000000e+00 : f32
    %101 = vector.broadcast %cst_30 : f32 to vector<3x32xf32>
    %102 = arith.subf %101, %95 : vector<3x32xf32>
    %103 = arith.mulf %102, %100 : vector<3x32xf32>
    %104 = arith.mulf %95, %57 : vector<3x32xf32>
    %105 = arith.addf %103, %104 : vector<3x32xf32>
    %106 = tpu.concatenate %83, %105 in 1 : vector<3x32xf32>, vector<3x32xf32> -> vector<3x64xf32>
    %cst_31 = arith.constant dense<0.000000e+00> : vector<3x192xf32>
    %107 = tpu.matmul %106, %5, %cst_31 {dimension_numbers = #tpu.dot_dimension_numbers<[1], [0], [0], [1], [0, 0, 1, 1], [], []>} : vector<3x64xf32>, vector<64x192xf32>, vector<3x192xf32> -> vector<3x192xf32>
    %108 = vector.broadcast %12 : vector<1x192xf32> to vector<3x192xf32>
    %109 = arith.addf %107, %108 : vector<3x192xf32>
    %110 = vector.extract_strided_slice %54 {offsets = [3, 0], sizes = [3, 96], strides = [1, 1]} : vector<6x96xf32> to vector<3x96xf32>
    %111 = vector.extract_strided_slice %109 {offsets = [0, 0], sizes = [3, 96], strides = [1, 1]} : vector<3x192xf32> to vector<3x96xf32>
    %112 = vector.extract_strided_slice %110 {offsets = [0, 0], sizes = [3, 64], strides = [1, 1]} : vector<3x96xf32> to vector<3x64xf32>
    %113 = vector.extract_strided_slice %111 {offsets = [0, 0], sizes = [3, 64], strides = [1, 1]} : vector<3x96xf32> to vector<3x64xf32>
    %114 = arith.addf %112, %113 : vector<3x64xf32>
    %115 = arith.negf %114 : vector<3x64xf32>
    %116 = math.exp %115 : vector<3x64xf32>
    %cst_32 = arith.constant 1.000000e+00 : f32
    %117 = vector.broadcast %cst_32 : f32 to vector<3x64xf32>
    %118 = arith.addf %117, %116 : vector<3x64xf32>
    %119 = arith.divf %117, %118 : vector<3x64xf32>
    %120 = vector.extract_strided_slice %119 {offsets = [0, 0], sizes = [3, 32], strides = [1, 1]} : vector<3x64xf32> to vector<3x32xf32>
    %121 = vector.extract_strided_slice %119 {offsets = [0, 32], sizes = [3, 32], strides = [1, 1]} : vector<3x64xf32> to vector<3x32xf32>
    %122 = vector.extract_strided_slice %110 {offsets = [0, 64], sizes = [3, 32], strides = [1, 1]} : vector<3x96xf32> to vector<3x32xf32>
    %123 = vector.extract_strided_slice %111 {offsets = [0, 64], sizes = [3, 32], strides = [1, 1]} : vector<3x96xf32> to vector<3x32xf32>
    %124 = arith.mulf %120, %123 : vector<3x32xf32>
    %125 = arith.addf %122, %124 : vector<3x32xf32>
    %126 = math.tanh %125 : vector<3x32xf32>
    %cst_33 = arith.constant 1.000000e+00 : f32
    %127 = vector.broadcast %cst_33 : f32 to vector<3x32xf32>
    %128 = arith.subf %127, %121 : vector<3x32xf32>
    %129 = arith.mulf %128, %126 : vector<3x32xf32>
    %130 = arith.mulf %121, %83 : vector<3x32xf32>
    %131 = arith.addf %129, %130 : vector<3x32xf32>
    %132 = vector.extract_strided_slice %55 {offsets = [0, 0], sizes = [3, 96], strides = [1, 1]} : vector<6x96xf32> to vector<3x96xf32>
    %133 = vector.extract_strided_slice %109 {offsets = [0, 96], sizes = [3, 96], strides = [1, 1]} : vector<3x192xf32> to vector<3x96xf32>
    %134 = vector.extract_strided_slice %132 {offsets = [0, 0], sizes = [3, 64], strides = [1, 1]} : vector<3x96xf32> to vector<3x64xf32>
    %135 = vector.extract_strided_slice %133 {offsets = [0, 0], sizes = [3, 64], strides = [1, 1]} : vector<3x96xf32> to vector<3x64xf32>
    %136 = arith.addf %134, %135 : vector<3x64xf32>
    %137 = arith.negf %136 : vector<3x64xf32>
    %138 = math.exp %137 : vector<3x64xf32>
    %cst_34 = arith.constant 1.000000e+00 : f32
    %139 = vector.broadcast %cst_34 : f32 to vector<3x64xf32>
    %140 = arith.addf %139, %138 : vector<3x64xf32>
    %141 = arith.divf %139, %140 : vector<3x64xf32>
    %142 = vector.extract_strided_slice %141 {offsets = [0, 0], sizes = [3, 32], strides = [1, 1]} : vector<3x64xf32> to vector<3x32xf32>
    %143 = vector.extract_strided_slice %141 {offsets = [0, 32], sizes = [3, 32], strides = [1, 1]} : vector<3x64xf32> to vector<3x32xf32>
    %144 = vector.extract_strided_slice %132 {offsets = [0, 64], sizes = [3, 32], strides = [1, 1]} : vector<3x96xf32> to vector<3x32xf32>
    %145 = vector.extract_strided_slice %133 {offsets = [0, 64], sizes = [3, 32], strides = [1, 1]} : vector<3x96xf32> to vector<3x32xf32>
    %146 = arith.mulf %142, %145 : vector<3x32xf32>
    %147 = arith.addf %144, %146 : vector<3x32xf32>
    %148 = math.tanh %147 : vector<3x32xf32>
    %cst_35 = arith.constant 1.000000e+00 : f32
    %149 = vector.broadcast %cst_35 : f32 to vector<3x32xf32>
    %150 = arith.subf %149, %143 : vector<3x32xf32>
    %151 = arith.mulf %150, %148 : vector<3x32xf32>
    %152 = arith.mulf %143, %105 : vector<3x32xf32>
    %153 = arith.addf %151, %152 : vector<3x32xf32>
    %154 = tpu.concatenate %83, %131 in 0 : vector<3x32xf32>, vector<3x32xf32> -> vector<6x32xf32>
    %155 = tpu.concatenate %153, %105 in 0 : vector<3x32xf32>, vector<3x32xf32> -> vector<6x32xf32>
    %156 = tpu.concatenate %154, %155 in 1 : vector<6x32xf32>, vector<6x32xf32> -> vector<6x64xf32>
    %cst_36 = arith.constant dense<0.000000e+00> : vector<6x1xf32>
    %157 = tpu.matmul %156, %7, %cst_36 {dimension_numbers = #tpu.dot_dimension_numbers<[1], [0], [0], [1], [0, 0, 1, 1], [], []>} : vector<6x64xf32>, vector<64x1xf32>, vector<6x1xf32> -> vector<6x1xf32>
    %158 = vector.broadcast %13 : vector<1x1xf32> to vector<6x1xf32>
    %159 = arith.addf %157, %158 : vector<6x1xf32>
    %160 = arith.addf %159, %2 : vector<6x1xf32>
    %cst_37 = arith.constant 1.000000e+02 : f32
    %161 = vector.broadcast %cst_37 : f32 to vector<6x1xf32>
    %162 = arith.mulf %160, %161 : vector<6x1xf32>
    %163 = arith.negf %162 : vector<6x1xf32>
    %164 = math.exp %163 : vector<6x1xf32>
    %cst_38 = arith.constant 1.000000e+00 : f32
    %165 = vector.broadcast %cst_38 : f32 to vector<6x1xf32>
    %166 = arith.addf %165, %164 : vector<6x1xf32>
    %167 = arith.divf %165, %166 : vector<6x1xf32>
    %168 = vector.extract_strided_slice %167 {offsets = [0, 0], sizes = [3, 1], strides = [1, 1]} : vector<6x1xf32> to vector<3x1xf32>
    %169 = vector.extract_strided_slice %167 {offsets = [3, 0], sizes = [3, 1], strides = [1, 1]} : vector<6x1xf32> to vector<3x1xf32>
    %170 = tpu.concatenate %168, %169 in 1 : vector<3x1xf32>, vector<3x1xf32> -> vector<3x2xf32>
    %171 = vector.extract_strided_slice %47 {offsets = [0, 0], sizes = [3, 32], strides = [1, 1]} : vector<3x64xf32> to vector<3x32xf32>
    %172 = vector.extract_strided_slice %47 {offsets = [0, 32], sizes = [3, 32], strides = [1, 1]} : vector<3x64xf32> to vector<3x32xf32>
    %cst_39 = arith.constant dense<0.000000e+00> : vector<3x3xf32>
    %173 = tpu.matmul %171, %172, %cst_39 {dimension_numbers = #tpu.dot_dimension_numbers<[1], [1], [0], [0], [0, 0, 1, 0], [], []>} : vector<3x32xf32>, vector<3x32xf32>, vector<3x3xf32> -> vector<3x3xf32>
    %174 = tpu.iota {dimensions = array<i32: 0>} : vector<3x3xi32>
    %175 = tpu.iota {dimensions = array<i32: 1>} : vector<3x3xi32>
    %176 = arith.cmpi eq, %174, %175 : vector<3x3xi32>
    %cst_40 = arith.constant -1.000000e+30 : f32
    %177 = vector.broadcast %cst_40 : f32 to vector<3x3xf32>
    %178 = arith.select %176, %177, %173 : vector<3x3xi1>, vector<3x3xf32>
    %cst_41 = arith.constant dense<0xFF800000> : vector<3xf32>
    %179 = vector.multi_reduction <maximumf>, %178, %cst_41 [1] : vector<3x3xf32> to vector<3xf32>
    %180 = vector.shape_cast %179 : vector<3xf32> to vector<3x1xf32>
    %181 = vector.broadcast %180 : vector<3x1xf32> to vector<3x3xf32>
    %182 = arith.subf %178, %181 : vector<3x3xf32>
    %183 = math.exp %182 : vector<3x3xf32>
    %cst_42 = arith.constant dense<0.000000e+00> : vector<3xf32>
    %184 = vector.multi_reduction <add>, %183, %cst_42 [1] : vector<3x3xf32> to vector<3xf32>
    %185 = vector.shape_cast %184 : vector<3xf32> to vector<3x1xf32>
    %186 = vector.broadcast %185 : vector<3x1xf32> to vector<3x3xf32>
    %187 = arith.divf %183, %186 : vector<3x3xf32>
    %188 = vector.extract_strided_slice %8 {offsets = [0, 0], sizes = [3, 3], strides = [1, 1]} : vector<6x3xf32> to vector<3x3xf32>
    %189 = arith.mulf %187, %188 : vector<3x3xf32>
    %cst_43 = arith.constant dense<0.000000e+00> : vector<3xf32>
    %190 = vector.multi_reduction <add>, %189, %cst_43 [1] : vector<3x3xf32> to vector<3xf32>
    %191 = vector.shape_cast %190 : vector<3xf32> to vector<3x1xf32>
    %192 = vector.extract_strided_slice %8 {offsets = [3, 0], sizes = [3, 3], strides = [1, 1]} : vector<6x3xf32> to vector<3x3xf32>
    %193 = arith.mulf %187, %192 : vector<3x3xf32>
    %cst_44 = arith.constant dense<0.000000e+00> : vector<3xf32>
    %194 = vector.multi_reduction <add>, %193, %cst_44 [1] : vector<3x3xf32> to vector<3xf32>
    %195 = vector.shape_cast %194 : vector<3xf32> to vector<3x1xf32>
    %196 = tpu.concatenate %191, %195 in 1 : vector<3x1xf32>, vector<3x1xf32> -> vector<3x2xf32>
    %197 = arith.mulf %196, %170 : vector<3x2xf32>
    %198 = vector.extract_strided_slice %0 {offsets = [0, 0], sizes = [1, 42], strides = [1, 1]} : vector<3x42xf32> to vector<1x42xf32>
    %199 = vector.extract_strided_slice %0 {offsets = [1, 0], sizes = [1, 42], strides = [1, 1]} : vector<3x42xf32> to vector<1x42xf32>
    %200 = vector.extract_strided_slice %0 {offsets = [2, 0], sizes = [1, 42], strides = [1, 1]} : vector<3x42xf32> to vector<1x42xf32>
    %201 = arith.subf %198, %199 : vector<1x42xf32>
    %202 = arith.subf %198, %200 : vector<1x42xf32>
    %203 = arith.subf %199, %200 : vector<1x42xf32>
    %204 = tpu.concatenate %201, %202, %203 in 0 : vector<1x42xf32>, vector<1x42xf32>, vector<1x42xf32> -> vector<3x42xf32>
    %205 = arith.mulf %204, %204 : vector<3x42xf32>
    %cst_45 = arith.constant dense<0.000000e+00> : vector<3xf32>
    %206 = vector.multi_reduction <add>, %205, %cst_45 [1] : vector<3x42xf32> to vector<3xf32>
    %207 = vector.shape_cast %206 : vector<3xf32> to vector<3x1xf32>
    %208 = vector.extract_strided_slice %207 {offsets = [0, 0], sizes = [1, 1], strides = [1, 1]} : vector<3x1xf32> to vector<1x1xf32>
    %209 = vector.extract_strided_slice %207 {offsets = [1, 0], sizes = [1, 1], strides = [1, 1]} : vector<3x1xf32> to vector<1x1xf32>
    %210 = tpu.concatenate %208, %209 in 1 : vector<1x1xf32>, vector<1x1xf32> -> vector<1x2xf32>
    %211 = vector.extract_strided_slice %207 {offsets = [0, 0], sizes = [1, 1], strides = [1, 1]} : vector<3x1xf32> to vector<1x1xf32>
    %212 = vector.extract_strided_slice %207 {offsets = [2, 0], sizes = [1, 1], strides = [1, 1]} : vector<3x1xf32> to vector<1x1xf32>
    %213 = tpu.concatenate %211, %212 in 1 : vector<1x1xf32>, vector<1x1xf32> -> vector<1x2xf32>
    %214 = vector.extract_strided_slice %207 {offsets = [1, 0], sizes = [1, 1], strides = [1, 1]} : vector<3x1xf32> to vector<1x1xf32>
    %215 = vector.extract_strided_slice %207 {offsets = [2, 0], sizes = [1, 1], strides = [1, 1]} : vector<3x1xf32> to vector<1x1xf32>
    %216 = tpu.concatenate %214, %215 in 1 : vector<1x1xf32>, vector<1x1xf32> -> vector<1x2xf32>
    %217 = tpu.concatenate %210, %213, %216 in 0 : vector<1x2xf32>, vector<1x2xf32>, vector<1x2xf32> -> vector<3x2xf32>
    %cst_46 = arith.constant 0.000000e+00 : f32
    %218 = vector.broadcast %cst_46 : f32 to vector<3x92xf32>
    %219 = tpu.concatenate %44, %197, %217, %218 in 1 : vector<3x32xf32>, vector<3x2xf32>, vector<3x2xf32>, vector<3x92xf32> -> vector<3x128xf32>
    %cst_47 = arith.constant 0.000000e+00 : f32
    %220 = vector.broadcast %cst_47 : f32 to vector<5x128xf32>
    %221 = tpu.concatenate %219, %220 in 0 : vector<3x128xf32>, vector<5x128xf32> -> vector<8x128xf32>
    %c0_48 = arith.constant 0 : index
    %c0_49 = arith.constant 0 : index
    %222 = vector.load %arg4[%c0_48, %c0_49] : memref<8x128xf32, #tpu.memory_space<vmem>>, vector<8x128xf32>
    tpu.vector_store %arg4[%c0_48, %c0_49], %221 {strides = array<i32>} : memref<8x128xf32, #tpu.memory_space<vmem>>, vector<8x128xf32>,
    return
  }
}

</mosaic_0001>

<llo_original>
// kernel: g2a_forward.1
$region0: #{g2a_forward.1}
  #allocation0 [shape = 'u32[]', space=smem, size = 0x4, offset = 0x4, fixed_abs, tag = 'smem constant byte address 0x4 - core index']
  #allocation1 [shape = 'u32[144,128]{1,0:T(1,128)}', space=vmem, size = 0x12000, scoped, tag = 'internal scratch']
  %s0 = inlined_call_operand.vmem [shape: f32[3,42], index: 0, kind: input, shape index: {}]
  %s1 = inlined_call_operand.vmem [shape: f32[3,32], index: 1, kind: input, shape index: {}]
  %s2 = inlined_call_operand.vmem [shape: f32[6,1], index: 2, kind: input, shape index: {}]
  %s3 = inlined_call_operand.hbm [shape: f32[168,448], index: 3, kind: input, shape index: {}]
  %s4 = inlined_call_operand.vmem [shape: f32[8,128], index: 4, kind: output, shape index: {}]
  %s5 = sld [smem:[#allocation0]]
  $region30: #{g2a_forward.1} parent=0
    _
  %s7 = ssub.s32 1, %s5
  %s8 = scalar_select 0, %s7, %s5
  $region1: #{g2a_forward.1} parent=0
    #allocation2 [shape = 'u8[344064]{0}', space=vmem, size = 0x54000, scoped, tag = 'input window, operand 3, single buffered']
    #allocation3 [shape = 's32[1]{0}', space=sflag, size = 0x4, scoped, tag = 'scoped memory for g2a_forward.1']
    %9 = vsyncpa [#allocation3], 0
    // Predicated region
    $region2: #{g2a_forward.1} parent=1 // pred_check
      _
    $region3: #{g2a_forward.1} parent=1 // pred_check_branch
      %11 = sbr.rel (0) target = $region5
    $region4: #{g2a_forward.1} parent=1 // pred_region
      _
    $region5: #{g2a_forward.1} parent=1 // pred_fallthru
      _
    // Predicated region
    $region6: #{g2a_forward.1} parent=1 // pred_check
      _
    $region7: #{g2a_forward.1} parent=1 // pred_check_branch
      %13 = sbr.rel (0) target = $region9
    $region8: #{g2a_forward.1} parent=1 // pred_region
      _
    $region9: #{g2a_forward.1} parent=1 // pred_fallthru
      _
    // Predicated region
    $region10: #{g2a_forward.1} parent=1 // pred_check
      _
    $region11: #{g2a_forward.1} parent=1 // pred_check_branch
      %15 = sbr.rel (0) target = $region13
    $region12: #{g2a_forward.1} parent=1 // pred_region
      _
    $region13: #{g2a_forward.1} parent=1 // pred_fallthru
      _
    // Predicated region
    $region14: #{g2a_forward.1} parent=1 // pred_check
      _
    $region15: #{g2a_forward.1} parent=1 // pred_check_branch
      %17 = sbr.rel (0) target = $region17
    $region16: #{g2a_forward.1} parent=1 // pred_region
      %s19 = ssub.s32 10752, 10752
      %20 = vsyncadd [#allocation3], %s19
      %s21 = sshll.u32 [#allocation2], 4
      %s22 = int_to_ptr.vmem [resolvable:$true] %s21
      %27 = dma.hbm_to_vmem [thread:$0]  %s3, 10752, %s22, [#allocation3], 512, 512, 32
    $region17: #{g2a_forward.1} parent=1 // pred_fallthru
      _
    // Predicated region
    $region18: #{g2a_forward.1} parent=1 // pred_check
      _
    $region19: #{g2a_forward.1} parent=1 // pred_check_branch
      %29 = sbr.rel (0) target = $region21
    $region20: #{g2a_forward.1} parent=1 // pred_region
      %30 = dma.done [#allocation3], 10752
    $region21: #{g2a_forward.1} parent=1 // pred_fallthru
      _
    %v31 = vld [vmem:[%s0] sm:$0x7]
    %v32 = vld [vmem:[%s1] sm:$0x7]
    %v33 = vld [vmem:[%s2] sm:$0x3f]
    %v34 = vld [vmem:[#allocation2] sm:$0xff]
    %v35 = vld [vmem:[#allocation2 + $0x8] sm:$0xff]
    %v36 = vld [vmem:[#allocation2 + $0x10] sm:$0xff]
    %v37 = vld [vmem:[#allocation2 + $0x18] sm:$0xff]
    %v38 = vld [vmem:[#allocation2 + $0x20] sm:$0xff]
    %v39 = vld [vmem:[#allocation2 + $0x28] sm:$0xff]
    %v40 = vld [vmem:[#allocation2 + $0x30] sm:$0xff]
    %v41 = vld [vmem:[#allocation2 + $0x38] sm:$0xff]
    %v42 = vld [vmem:[#allocation2 + $0x40] sm:$0xff]
    %v43 = vld [vmem:[#allocation2 + $0x48] sm:$0xff]
    %v44 = vld [vmem:[#allocation2 + $0x50] sm:$0xff]
    %v45 = vld [vmem:[#allocation2 + $0x58] sm:$0xff]
    %v46 = vld [vmem:[#allocation2 + $0x60] sm:$0xff]
    %v47 = vld [vmem:[#allocation2 + $0x68] sm:$0xff]
    %v48 = vld [vmem:[#allocation2 + $0x70] sm:$0xff]
    %v49 = vld [vmem:[#allocation2 + $0x78] sm:$0xff]
    %v50 = vld [vmem:[#allocation2 + $0x80] sm:$0xff]
    %v51 = vld [vmem:[#allocation2 + $0x88] sm:$0xff]
    %v52 = vld [vmem:[#allocation2 + $0xa0] sm:$0xff]
    %v53 = vld [vmem:[#allocation2 + $0xa8] sm:$0xff]
    %v54 = vld [vmem:[#allocation2 + $0xc0] sm:$0xff]
    %v55 = vld [vmem:[#allocation2 + $0xc8] sm:$0xff]
    %v56 = vld [vmem:[#allocation2 + $0xe0] sm:$0xff]
    %v57 = vld [vmem:[#allocation2 + $0xe8] sm:$0xff]
    %v58 = vld [vmem:[#allocation2 + $0x100] sm:$0xff]
    %v59 = vld [vmem:[#allocation2 + $0x108] sm:$0xff]
    %v60 = vld [vmem:[#allocation2 + $0x120] sm:$0xff]
    %v61 = vld [vmem:[#allocation2 + $0x128] sm:$0xff]
    %v62 = vld [vmem:[#allocation2 + $0x140] sm:$0xff]
    %v63 = vld [vmem:[#allocation2 + $0x148] sm:$0xff]
    %v64 = vld [vmem:[#allocation2 + $0x160] sm:$0xff]
    %v65 = vld [vmem:[#allocation2 + $0x168] sm:$0xff]
    %v66 = vld [vmem:[#allocation2 + $0x90] sm:$0xff]
    %v67 = vld [vmem:[#allocation2 + $0x98] sm:$0xff]
    %v68 = vld [vmem:[#allocation2 + $0xb0] sm:$0xff]
    %v69 = vld [vmem:[#allocation2 + $0xb8] sm:$0xff]
    %v70 = vld [vmem:[#allocation2 + $0xd0] sm:$0xff]
    %v71 = vld [vmem:[#allocation2 + $0xd8] sm:$0xff]
    %v72 = vld [vmem:[#allocation2 + $0xf0] sm:$0xff]
    %v73 = vld [vmem:[#allocation2 + $0xf8] sm:$0xff]
    %v74 = vld [vmem:[#allocation2 + $0x110] sm:$0xff]
    %v75 = vld [vmem:[#allocation2 + $0x118] sm:$0xff]
    %v76 = vld [vmem:[#allocation2 + $0x130] sm:$0xff]
    %v77 = vld [vmem:[#allocation2 + $0x138] sm:$0xff]
    %v78 = vld [vmem:[#allocation2 + $0x150] sm:$0xff]
    %v79 = vld [vmem:[#allocation2 + $0x158] sm:$0xff]
    %v80 = vld [vmem:[#allocation2 + $0x170] sm:$0xff]
    %v81 = vld [vmem:[#allocation2 + $0x178] sm:$0xff]
    %v82 = vld [vmem:[#allocation2 + $0x180] sm:$0xff]
    %v83 = vld [vmem:[#allocation2 + $0x1a0] sm:$0xff]
    %v84 = vld [vmem:[#allocation2 + $0x1c0] sm:$0xff]
    %v85 = vld [vmem:[#allocation2 + $0x1e0] sm:$0xff]
    %v86 = vld [vmem:[#allocation2 + $0x200] sm:$0xff]
    %v87 = vld [vmem:[#allocation2 + $0x220] sm:$0x3]
    %v88 = vld [vmem:[#allocation2 + $0x188] sm:$0xff]
    %v89 = vld [vmem:[#allocation2 + $0x1a8] sm:$0xff]
    %v90 = vld [vmem:[#allocation2 + $0x1c8] sm:$0xff]
    %v91 = vld [vmem:[#allocation2 + $0x1e8] sm:$0xff]
    %v92 = vld [vmem:[#allocation2 + $0x208] sm:$0xff]
    %v93 = vld [vmem:[#allocation2 + $0x228] sm:$0xff]
    %v94 = vld [vmem:[#allocation2 + $0x248] sm:$0xff]
    %v95 = vld [vmem:[#allocation2 + $0x268] sm:$0xff]
    %v96 = vld [vmem:[#allocation2 + $0x190] sm:$0x3f]
    %v97 = vld [vmem:[#allocation2 + $0x280] ss:$0 sm:$0xff]
    %s98 = scalar_lea.vmem [#allocation2], 641
    %v99 = vld [vmem:[%s98] ss:$8 sm:$0x3]
    %s100 = scalar_lea.vmem [#allocation2], 642
    %v101 = vld [vmem:[%s100] ss:$8 sm:$0x3]
    %s102 = scalar_lea.vmem [#allocation2], 643
    %v103 = vld [vmem:[%s102] ss:$8 sm:$0x3]
    %v104 = vld [vmem:[#allocation2 + $0x284] ss:$0 sm:$0xff]
    %vm105 = vcmask 343040
    %v107 = vsel %vm105, %v31, 0
    %vm109 = vcmask 1041408
    %v111 = vsel %vm109, %v87, 0
    %113 = vmatprep.subr.mxu0 0.0
    %114 = vmatpush1.msra.mxu0 %v82
    %115 = vmatprep.subr.mxu0 0.0
    %116 = vmatpush1.msra.mxu0 %v83
    %117 = vmatprep.subr.mxu0 0.0
    %118 = vmatpush1.msra.mxu0 %v84
    %119 = vmatprep.subr.mxu0 0.0
    %120 = vmatpush1.msra.mxu0 %v85
    %121 = vmatprep.subr.mxu0 0.0
    %122 = vmatpush1.msra.mxu0 %v86
    %123 = vmatprep.subr.mxu0 0.0
    %124 = vmatpush1.msra.mxu0 %v111
    %125 = vmatprep.subr.mxu0 0.0
    %126 = vmatpush1.msra.mxu0 0.0
    %127 = vmatprep.subr.mxu0 0.0
    %128 = vmatpush1.msra.mxu0 0.0
    %129 = vmatprep.subr.mxu0 0.0
    %130 = vmatpush1.msra.mxu0 0.0
    %131 = vmatprep.subr.mxu0 0.0
    %132 = vmatpush1.msra.mxu0 0.0
    %133 = vmatprep.subr.mxu0 0.0
    %134 = vmatpush1.msra.mxu0 0.0
    %135 = vmatprep.subr.mxu0 0.0
    %136 = vmatpush1.msra.mxu0 0.0
    %137 = vmatprep.subr.mxu0 0.0
    %138 = vmatpush1.msra.mxu0 0.0
    %139 = vmatprep.subr.mxu0 0.0
    %140 = vmatpush1.msra.mxu0 0.0
    %141 = vmatprep.subr.mxu0 0.0
    %142 = vmatpush1.msra.mxu0 0.0
    %143 = vmatprep.subr.mxu0 0.0
    %144 = vmatpush1.msra.mxu0 0.0
    %145 = vmatprep.subr.mxu0 0.0
    %146 = vmatpush1.msra.mxu0 0.0
    %147 = vmatprep.subr.mxu0 0.0
    %148 = vmatpush1.msra.mxu0 0.0
    %149 = vmatprep.subr.mxu0 0.0
    %150 = vmatpush1.msra.mxu0 0.0
    %151 = vmatprep.subr.mxu0 0.0
    %152 = vmatpush1.msra.mxu0 0.0
    %153 = vmatprep.subr.mxu0 0.0
    %154 = vmatpush1.msra.mxu0 0.0
    %155 = vmatprep.subr.mxu0 0.0
    %156 = vmatpush1.msra.mxu0 0.0
    %157 = vmatprep.subr.mxu0 0.0
    %158 = vmatpush1.msra.mxu0 0.0
    %159 = vmatprep.subr.mxu0 0.0
    %160 = vmatpush1.msra.mxu0 0.0
    %161 = vmatprep.subr.mxu0 0.0
    %162 = vmatpush1.msra.mxu0 0.0
    %163 = vmatprep.subr.mxu0 0.0
    %164 = vmatpush1.msra.mxu0 0.0
    %165 = vmatprep.subr.mxu0 0.0
    %166 = vmatpush1.msra.mxu0 0.0
    %167 = vmatprep.subr.mxu0 0.0
    %168 = vmatpush1.msra.mxu0 0.0
    %169 = vmatprep.subr.mxu0 0.0
    %170 = vmatpush1.msra.mxu0 0.0
    %171 = vmatprep.subr.mxu0 0.0
    %172 = vmatpush1.msra.mxu0 0.0
    %173 = vmatprep.subr.mxu0 0.0
    %174 = vmatpush1.msra.mxu0 0.0
    %175 = vmatprep.subr.mxu0 0.0
    %176 = vmatpush1.msra.mxu0 0.0
    %177 = vmatprep.mubr.f32.mxu0 0.0
    %178 = vmatmul.mubr.f32.gmra.mrb[0].mxu0 %v107
    %v179 = vpop.f32.mrb[0].mxu0
    %v180 = vadd.f32 %v97, %v179
    %v181 = vpop.f32.mrb[0].mxu0
    %182 = vdwg.mxu0
    %v183 = vmax.f32 %v180, 0.0
    %185 = vrot.lane.b32.xlu0 %v32, 32
    %v186 = vpop.permute.xlu0 %185
    %vm188 = vcmask 261120
    %v189 = vsel %vm188, %v183, %v186
    %v191 = vlaneseq
    %v192 = vshrl.u32 %v191, 7
    %v193 = vsub.s32 0, %v192
    %v194 = vrot.slane %v99, %v193
    %v195 = vlaneseq
    %v196 = vshrl.u32 %v195, 7
    %v197 = vsub.s32 1, %v196
    %v198 = vrot.slane %v99, %v197
    %vm201 = vcmask 523264
    %v203 = vsel %vm201, %v189, 0
    %205 = vmatprep.subr.mxu0 %v51
    %206 = vmatpush1.msra.mxu0 %v50
    %207 = vmatprep.subr.mxu0 %v53
    %208 = vmatpush1.msra.mxu0 %v52
    %209 = vmatprep.subr.mxu0 %v55
    %210 = vmatpush1.msra.mxu0 %v54
    %211 = vmatprep.subr.mxu0 %v57
    %212 = vmatpush1.msra.mxu0 %v56
    %213 = vmatprep.subr.mxu0 %v59
    %214 = vmatpush1.msra.mxu0 %v58
    %215 = vmatprep.subr.mxu0 %v61
    %216 = vmatpush1.msra.mxu0 %v60
    %217 = vmatprep.subr.mxu0 %v63
    %218 = vmatpush1.msra.mxu0 %v62
    %219 = vmatprep.subr.mxu0 %v65
    %220 = vmatpush1.msra.mxu0 %v64
    %221 = vmatprep.subr.mxu0 0.0
    %222 = vmatpush1.msra.mxu0 0.0
    %223 = vmatprep.subr.mxu0 0.0
    %224 = vmatpush1.msra.mxu0 0.0
    %225 = vmatprep.subr.mxu0 0.0
    %226 = vmatpush1.msra.mxu0 0.0
    %227 = vmatprep.subr.mxu0 0.0
    %228 = vmatpush1.msra.mxu0 0.0
    %229 = vmatprep.subr.mxu0 0.0
    %230 = vmatpush1.msra.mxu0 0.0
    %231 = vmatprep.subr.mxu0 0.0
    %232 = vmatpush1.msra.mxu0 0.0
    %233 = vmatprep.subr.mxu0 0.0
    %234 = vmatpush1.msra.mxu0 0.0
    %235 = vmatprep.subr.mxu0 0.0
    %236 = vmatpush1.msra.mxu0 0.0
    %237 = vmatprep.subr.mxu0 0.0
    %238 = vmatpush1.msra.mxu0 0.0
    %239 = vmatprep.subr.mxu0 0.0
    %240 = vmatpush1.msra.mxu0 0.0
    %241 = vmatprep.subr.mxu0 0.0
    %242 = vmatpush1.msra.mxu0 0.0
    %243 = vmatprep.subr.mxu0 0.0
    %244 = vmatpush1.msra.mxu0 0.0
    %245 = vmatprep.subr.mxu0 0.0
    %246 = vmatpush1.msra.mxu0 0.0
    %247 = vmatprep.subr.mxu0 0.0
    %248 = vmatpush1.msra.mxu0 0.0
    %249 = vmatprep.subr.mxu0 0.0
    %250 = vmatpush1.msra.mxu0 0.0
    %251 = vmatprep.subr.mxu0 0.0
    %252 = vmatpush1.msra.mxu0 0.0
    %253 = vmatprep.subr.mxu0 0.0
    %254 = vmatpush1.msra.mxu0 0.0
    %255 = vmatprep.subr.mxu0 0.0
    %256 = vmatpush1.msra.mxu0 0.0
    %257 = vmatprep.subr.mxu0 0.0
    %258 = vmatpush1.msra.mxu0 0.0
    %259 = vmatprep.subr.mxu0 0.0
    %260 = vmatpush1.msra.mxu0 0.0
    %261 = vmatprep.subr.mxu0 0.0
    %262 = vmatpush1.msra.mxu0 0.0
    %263 = vmatprep.subr.mxu0 0.0
    %264 = vmatpush1.msra.mxu0 0.0
    %265 = vmatprep.subr.mxu0 0.0
    %266 = vmatpush1.msra.mxu0 0.0
    %267 = vmatprep.subr.mxu0 0.0
    %268 = vmatpush1.msra.mxu0 0.0
    %269 = vmatprep.mubr.f32.mxu0 0.0
    %270 = vmatmul.mubr.f32.gmra.mrb[0].mxu0 %v203
    %v271 = vpop.f32.mrb[0].mxu0
    %v272 = vadd.f32 %v194, %v271
    %v273 = vpop.f32.mrb[0].mxu0
    %v274 = vadd.f32 %v198, %v273
    %275 = vdwg.mxu0
    %278 = vrot.lane.b32.xlu0 %v272, 32
    %v279 = vpop.permute.xlu0 %278
    %280 = vrot.lane.b32.xlu0 %v274, 32
    %v281 = vpop.permute.xlu0 %280
    %v282 = vsel %vm188, %v279, %v281
    %v284 = vadd.f32 %v272, %v282
    %v285 = vxor.u32 %v284, 2147483648
    %v286 = vmul.f32 %v285, 1.442695
    %v287 = vpow.pop %v286
    %v288 = vadd.f32 %v287, 1.0
    %v289 = vrcp.pop %v288
    %v290 = vmul.f32 1.0, %v289
    %291 = vrot.lane.b32.xlu0 %v274, 96
    %v292 = vpop.permute.xlu0 %291
    %v294 = vmul.f32 %v290, %v292
    %296 = vrot.lane.b32.xlu0 %v294, 64
    %v297 = vpop.permute.xlu0 %296
    %v299 = vadd.f32 %v272, %v297
    %v300 = vtanh.pop %v299
    %v301 = vsub.f32 1.0, %v290
    %303 = vrot.lane.b32.xlu0 %v300, 96
    %v304 = vpop.permute.xlu0 %303
    %v306 = vmul.f32 %v301, %v304
    %v307 = vmul.f32 %v290, %v186
    %v308 = vadd.f32 %v306, %v307
    %310 = vrot.lane.b32.xlu0 %v308, 96
    %v311 = vpop.permute.xlu0 %310
    %v312 = vsel %vm188, %v311, 0
    %314 = vmatprep.subr.mxu0 %v35
    %315 = vmatpush1.msra.mxu0 %v34
    %316 = vmatprep.subr.mxu0 %v39
    %317 = vmatpush1.msra.mxu0 %v38
    %318 = vmatprep.subr.mxu0 %v43
    %319 = vmatpush1.msra.mxu0 %v42
    %320 = vmatprep.subr.mxu0 %v47
    %321 = vmatpush1.msra.mxu0 %v46
    %322 = vmatprep.subr.mxu0 0.0
    %323 = vmatpush1.msra.mxu0 0.0
    %324 = vmatprep.subr.mxu0 0.0
    %325 = vmatpush1.msra.mxu0 0.0
    %326 = vmatprep.subr.mxu0 0.0
    %327 = vmatpush1.msra.mxu0 0.0
    %328 = vmatprep.subr.mxu0 0.0
    %329 = vmatpush1.msra.mxu0 0.0
    %330 = vmatprep.subr.mxu0 0.0
    %331 = vmatpush1.msra.mxu0 0.0
    %332 = vmatprep.subr.mxu0 0.0
    %333 = vmatpush1.msra.mxu0 0.0
    %334 = vmatprep.subr.mxu0 0.0
    %335 = vmatpush1.msra.mxu0 0.0
    %336 = vmatprep.subr.mxu0 0.0
    %337 = vmatpush1.msra.mxu0 0.0
    %338 = vmatprep.subr.mxu0 0.0
    %339 = vmatpush1.msra.mxu0 0.0
    %340 = vmatprep.subr.mxu0 0.0
    %341 = vmatpush1.msra.mxu0 0.0
    %342 = vmatprep.subr.mxu0 0.0
    %343 = vmatpush1.msra.mxu0 0.0
    %344 = vmatprep.subr.mxu0 0.0
    %345 = vmatpush1.msra.mxu0 0.0
    %346 = vmatprep.subr.mxu0 0.0
    %347 = vmatpush1.msra.mxu0 0.0
    %348 = vmatprep.subr.mxu0 0.0
    %349 = vmatpush1.msra.mxu0 0.0
    %350 = vmatprep.subr.mxu0 0.0
    %351 = vmatpush1.msra.mxu0 0.0
    %352 = vmatprep.subr.mxu0 0.0
    %353 = vmatpush1.msra.mxu0 0.0
    %354 = vmatprep.subr.mxu0 0.0
    %355 = vmatpush1.msra.mxu0 0.0
    %356 = vmatprep.subr.mxu0 0.0
    %357 = vmatpush1.msra.mxu0 0.0
    %358 = vmatprep.subr.mxu0 0.0
    %359 = vmatpush1.msra.mxu0 0.0
    %360 = vmatprep.subr.mxu0 0.0
    %361 = vmatpush1.msra.mxu0 0.0
    %362 = vmatprep.subr.mxu0 0.0
    %363 = vmatpush1.msra.mxu0 0.0
    %364 = vmatprep.subr.mxu0 0.0
    %365 = vmatpush1.msra.mxu0 0.0
    %366 = vmatprep.subr.mxu0 0.0
    %367 = vmatpush1.msra.mxu0 0.0
    %368 = vmatprep.subr.mxu0 0.0
    %369 = vmatpush1.msra.mxu0 0.0
    %370 = vmatprep.subr.mxu0 0.0
    %371 = vmatpush1.msra.mxu0 0.0
    %372 = vmatprep.subr.mxu0 0.0
    %373 = vmatpush1.msra.mxu0 0.0
    %374 = vmatprep.subr.mxu0 0.0
    %375 = vmatpush1.msra.mxu0 0.0
    %376 = vmatprep.subr.mxu0 0.0
    %377 = vmatpush1.msra.mxu0 0.0
    %378 = vmatprep.mubr.f32.mxu0 0.0
    %379 = vmatmul.mubr.f32.gmra.mrb[0].mxu0 %v312
    %v380 = vpop.f32.mrb[0].mxu0
    %v381 = vadd.f32 0.0, %v380
    %v382 = vpop.f32.mrb[0].mxu0
    %v383 = vadd.f32 0.0, %v382
    %384 = vdwg.mxu0
    %385 = vmatprep.subr.mxu0 %v37
    %386 = vmatpush1.msra.mxu0 %v36
    %387 = vmatprep.subr.mxu0 %v41
    %388 = vmatpush1.msra.mxu0 %v40
    %389 = vmatprep.subr.mxu0 %v45
    %390 = vmatpush1.msra.mxu0 %v44
    %391 = vmatprep.subr.mxu0 %v49
    %392 = vmatpush1.msra.mxu0 %v48
    %393 = vmatprep.subr.mxu0 0.0
    %394 = vmatpush1.msra.mxu0 0.0
    %395 = vmatprep.subr.mxu0 0.0
    %396 = vmatpush1.msra.mxu0 0.0
    %397 = vmatprep.subr.mxu0 0.0
    %398 = vmatpush1.msra.mxu0 0.0
    %399 = vmatprep.subr.mxu0 0.0
    %400 = vmatpush1.msra.mxu0 0.0
    %401 = vmatprep.subr.mxu0 0.0
    %402 = vmatpush1.msra.mxu0 0.0
    %403 = vmatprep.subr.mxu0 0.0
    %404 = vmatpush1.msra.mxu0 0.0
    %405 = vmatprep.subr.mxu0 0.0
    %406 = vmatpush1.msra.mxu0 0.0
    %407 = vmatprep.subr.mxu0 0.0
    %408 = vmatpush1.msra.mxu0 0.0
    %409 = vmatprep.subr.mxu0 0.0
    %410 = vmatpush1.msra.mxu0 0.0
    %411 = vmatprep.subr.mxu0 0.0
    %412 = vmatpush1.msra.mxu0 0.0
    %413 = vmatprep.subr.mxu0 0.0
    %414 = vmatpush1.msra.mxu0 0.0
    %415 = vmatprep.subr.mxu0 0.0
    %416 = vmatpush1.msra.mxu0 0.0
    %417 = vmatprep.subr.mxu0 0.0
    %418 = vmatpush1.msra.mxu0 0.0
    %419 = vmatprep.subr.mxu0 0.0
    %420 = vmatpush1.msra.mxu0 0.0
    %421 = vmatprep.subr.mxu0 0.0
    %422 = vmatpush1.msra.mxu0 0.0
    %423 = vmatprep.subr.mxu0 0.0
    %424 = vmatpush1.msra.mxu0 0.0
    %425 = vmatprep.subr.mxu0 0.0
    %426 = vmatpush1.msra.mxu0 0.0
    %427 = vmatprep.subr.mxu0 0.0
    %428 = vmatpush1.msra.mxu0 0.0
    %429 = vmatprep.subr.mxu0 0.0
    %430 = vmatpush1.msra.mxu0 0.0
    %431 = vmatprep.subr.mxu0 0.0
    %432 = vmatpush1.msra.mxu0 0.0
    %433 = vmatprep.subr.mxu0 0.0
    %434 = vmatpush1.msra.mxu0 0.0
    %435 = vmatprep.subr.mxu0 0.0
    %436 = vmatpush1.msra.mxu0 0.0
    %437 = vmatprep.subr.mxu0 0.0
    %438 = vmatpush1.msra.mxu0 0.0
    %439 = vmatprep.subr.mxu0 0.0
    %440 = vmatpush1.msra.mxu0 0.0
    %441 = vmatprep.subr.mxu0 0.0
    %442 = vmatpush1.msra.mxu0 0.0
    %443 = vmatprep.subr.mxu0 0.0
    %444 = vmatpush1.msra.mxu0 0.0
    %445 = vmatprep.subr.mxu0 0.0
    %446 = vmatpush1.msra.mxu0 0.0
    %447 = vmatprep.subr.mxu0 0.0
    %448 = vmatpush1.msra.mxu0 0.0
    %449 = vmatprep.mubr.f32.mxu0 0.0
    %450 = vmatmul.mubr.f32.gmra.mrb[0].mxu0 %v312
    %v451 = vpop.f32.mrb[0].mxu0
    %v452 = vadd.f32 0.0, %v451
    %v453 = vpop.f32.mrb[0].mxu0
    %v454 = vadd.f32 0.0, %v453
    %455 = vdwg.mxu0
    %v458 = vrot.slane %v381, 5
    %v459 = vrot.slane %v383, 5
    %vm462 = vcmask 1042432
    %v463 = vsel %vm462, %v381, %v458
    %v464 = vsel %vm462, %v383, %v459
    %vm465 = vcmask 23552
    %v467 = vsel %vm465, %v96, 0
    %v470 = vsel %vm462, %v452, 0
    %v473 = vsel %vm462, %v454, 0
    %475 = vmatprep.subr.mxu0 %v473
    %476 = vmatpush1.msra.mxu0 %v470
    %477 = vmatprep.subr.mxu0 0.0
    %478 = vmatpush1.msra.mxu0 0.0
    %479 = vmatprep.subr.mxu0 0.0
    %480 = vmatpush1.msra.mxu0 0.0
    %481 = vmatprep.subr.mxu0 0.0
    %482 = vmatpush1.msra.mxu0 0.0
    %483 = vmatprep.subr.mxu0 0.0
    %484 = vmatpush1.msra.mxu0 0.0
    %485 = vmatprep.subr.mxu0 0.0
    %486 = vmatpush1.msra.mxu0 0.0
    %487 = vmatprep.subr.mxu0 0.0
    %488 = vmatpush1.msra.mxu0 0.0
    %489 = vmatprep.subr.mxu0 0.0
    %490 = vmatpush1.msra.mxu0 0.0
    %491 = vmatprep.subr.mxu0 0.0
    %492 = vmatpush1.msra.mxu0 0.0
    %493 = vmatprep.subr.mxu0 0.0
    %494 = vmatpush1.msra.mxu0 0.0
    %495 = vmatprep.subr.mxu0 0.0
    %496 = vmatpush1.msra.mxu0 0.0
    %497 = vmatprep.subr.mxu0 0.0
    %498 = vmatpush1.msra.mxu0 0.0
    %499 = vmatprep.subr.mxu0 0.0
    %500 = vmatpush1.msra.mxu0 0.0
    %501 = vmatprep.subr.mxu0 0.0
    %502 = vmatpush1.msra.mxu0 0.0
    %503 = vmatprep.subr.mxu0 0.0
    %504 = vmatpush1.msra.mxu0 0.0
    %505 = vmatprep.subr.mxu0 0.0
    %506 = vmatpush1.msra.mxu0 0.0
    %507 = vmatprep.subr.mxu0 0.0
    %508 = vmatpush1.msra.mxu0 0.0
    %509 = vmatprep.subr.mxu0 0.0
    %510 = vmatpush1.msra.mxu0 0.0
    %511 = vmatprep.subr.mxu0 0.0
    %512 = vmatpush1.msra.mxu0 0.0
    %513 = vmatprep.subr.mxu0 0.0
    %514 = vmatpush1.msra.mxu0 0.0
    %515 = vmatprep.subr.mxu0 0.0
    %516 = vmatpush1.msra.mxu0 0.0
    %517 = vmatprep.subr.mxu0 0.0
    %518 = vmatpush1.msra.mxu0 0.0
    %519 = vmatprep.subr.mxu0 0.0
    %520 = vmatpush1.msra.mxu0 0.0
    %521 = vmatprep.subr.mxu0 0.0
    %522 = vmatpush1.msra.mxu0 0.0
    %523 = vmatprep.subr.mxu0 0.0
    %524 = vmatpush1.msra.mxu0 0.0
    %525 = vmatprep.subr.mxu0 0.0
    %526 = vmatpush1.msra.mxu0 0.0
    %527 = vmatprep.subr.mxu0 0.0
    %528 = vmatpush1.msra.mxu0 0.0
    %529 = vmatprep.subr.mxu0 0.0
    %530 = vmatpush1.msra.mxu0 0.0
    %531 = vmatprep.subr.mxu0 0.0
    %532 = vmatpush1.msra.mxu0 0.0
    %533 = vmatprep.subr.mxu0 0.0
    %534 = vmatpush1.msra.mxu0 0.0
    %535 = vmatprep.subr.mxu0 0.0
    %536 = vmatpush1.msra.mxu0 0.0
    %537 = vmatprep.subr.mxu0 0.0
    %538 = vmatpush1.msra.mxu0 0.0
    %539 = vmatprep.mubr.f32.mxu0 0.0
    %540 = vmatmul.mubr.f32.gmra.mrb[0].mxu0 %v467
    %v541 = vpop.f32.mrb[0].mxu0
    %v542 = vadd.f32 0.0, %v541
    %v543 = vpop.f32.mrb[0].mxu0
    %v544 = vadd.f32 0.0, %v543
    %545 = vdwg.mxu0
    %v546 = vadd.f32 %v463, %v542
    %v547 = vadd.f32 %v464, %v544
    %v549 = vlaneseq
    %v550 = vshrl.u32 %v549, 7
    %v551 = vsub.s32 0, %v550
    %v552 = vrot.slane %v101, %v551
    %v553 = vlaneseq
    %v554 = vshrl.u32 %v553, 7
    %v555 = vsub.s32 1, %v554
    %v556 = vrot.slane %v101, %v555
    %v559 = vadd.f32 %v546, %v552
    %v560 = vadd.f32 %v547, %v556
    %v562 = vlaneseq
    %v563 = vshrl.u32 %v562, 7
    %v564 = vsub.s32 0, %v563
    %v565 = vrot.slane %v103, %v564
    %v566 = vlaneseq
    %v567 = vshrl.u32 %v566, 7
    %v568 = vsub.s32 1, %v567
    %v569 = vrot.slane %v103, %v568
    %v573 = vsel %vm201, 0.0, 0
    %575 = vmatprep.subr.mxu0 %v67
    %576 = vmatpush1.msra.mxu0 %v66
    %577 = vmatprep.subr.mxu0 %v69
    %578 = vmatpush1.msra.mxu0 %v68
    %579 = vmatprep.subr.mxu0 %v71
    %580 = vmatpush1.msra.mxu0 %v70
    %581 = vmatprep.subr.mxu0 %v73
    %582 = vmatpush1.msra.mxu0 %v72
    %583 = vmatprep.subr.mxu0 %v75
    %584 = vmatpush1.msra.mxu0 %v74
    %585 = vmatprep.subr.mxu0 %v77
    %586 = vmatpush1.msra.mxu0 %v76
    %587 = vmatprep.subr.mxu0 %v79
    %588 = vmatpush1.msra.mxu0 %v78
    %589 = vmatprep.subr.mxu0 %v81
    %590 = vmatpush1.msra.mxu0 %v80
    %591 = vmatprep.subr.mxu0 0.0
    %592 = vmatpush1.msra.mxu0 0.0
    %593 = vmatprep.subr.mxu0 0.0
    %594 = vmatpush1.msra.mxu0 0.0
    %595 = vmatprep.subr.mxu0 0.0
    %596 = vmatpush1.msra.mxu0 0.0
    %597 = vmatprep.subr.mxu0 0.0
    %598 = vmatpush1.msra.mxu0 0.0
    %599 = vmatprep.subr.mxu0 0.0
    %600 = vmatpush1.msra.mxu0 0.0
    %601 = vmatprep.subr.mxu0 0.0
    %602 = vmatpush1.msra.mxu0 0.0
    %603 = vmatprep.subr.mxu0 0.0
    %604 = vmatpush1.msra.mxu0 0.0
    %605 = vmatprep.subr.mxu0 0.0
    %606 = vmatpush1.msra.mxu0 0.0
    %607 = vmatprep.subr.mxu0 0.0
    %608 = vmatpush1.msra.mxu0 0.0
    %609 = vmatprep.subr.mxu0 0.0
    %610 = vmatpush1.msra.mxu0 0.0
    %611 = vmatprep.subr.mxu0 0.0
    %612 = vmatpush1.msra.mxu0 0.0
    %613 = vmatprep.subr.mxu0 0.0
    %614 = vmatpush1.msra.mxu0 0.0
    %615 = vmatprep.subr.mxu0 0.0
    %616 = vmatpush1.msra.mxu0 0.0
    %617 = vmatprep.subr.mxu0 0.0
    %618 = vmatpush1.msra.mxu0 0.0
    %619 = vmatprep.subr.mxu0 0.0
    %620 = vmatpush1.msra.mxu0 0.0
    %621 = vmatprep.subr.mxu0 0.0
    %622 = vmatpush1.msra.mxu0 0.0
    %623 = vmatprep.subr.mxu0 0.0
    %624 = vmatpush1.msra.mxu0 0.0
    %625 = vmatprep.subr.mxu0 0.0
    %626 = vmatpush1.msra.mxu0 0.0
    %627 = vmatprep.subr.mxu0 0.0
    %628 = vmatpush1.msra.mxu0 0.0
    %629 = vmatprep.subr.mxu0 0.0
    %630 = vmatpush1.msra.mxu0 0.0
    %631 = vmatprep.subr.mxu0 0.0
    %632 = vmatpush1.msra.mxu0 0.0
    %633 = vmatprep.subr.mxu0 0.0
    %634 = vmatpush1.msra.mxu0 0.0
    %635 = vmatprep.subr.mxu0 0.0
    %636 = vmatpush1.msra.mxu0 0.0
    %637 = vmatprep.subr.mxu0 0.0
    %638 = vmatpush1.msra.mxu0 0.0
    %639 = vmatprep.mubr.f32.mxu0 0.0
    %640 = vmatmul.mubr.f32.gmra.mrb[0].mxu0 %v573
    %v641 = vpop.f32.mrb[0].mxu0
    %v642 = vadd.f32 %v565, %v641
    %v643 = vpop.f32.mrb[0].mxu0
    %v644 = vadd.f32 %v569, %v643
    %645 = vdwg.mxu0
    %v646 = vadd.f32 %v559, %v642
    %v647 = vxor.u32 %v646, 2147483648
    %v648 = vmul.f32 %v647, 1.442695
    %v649 = vpow.pop %v648
    %v650 = vadd.f32 %v649, 1.0
    %v651 = vrcp.pop %v650
    %v652 = vmul.f32 1.0, %v651
    %654 = vrot.lane.b32.xlu0 %v642, 64
    %v655 = vpop.permute.xlu0 %654
    %v657 = vmul.f32 %v652, %v655
    %659 = vrot.lane.b32.xlu0 %v657, 64
    %v660 = vpop.permute.xlu0 %659
    %v662 = vadd.f32 %v559, %v660
    %v663 = vtanh.pop %v662
    %v664 = vsub.f32 1.0, %v652
    %666 = vrot.lane.b32.xlu0 %v663, 96
    %v667 = vpop.permute.xlu0 %666
    %v669 = vmul.f32 %v664, %v667
    %v670 = vmul.f32 %v652, 0.0
    %v671 = vadd.f32 %v669, %v670
    %v673 = vrot.slane %v642, 5
    %v674 = vrot.slane %v644, 5
    %v677 = vadd.f32 %v559, %v673
    %v678 = vadd.f32 %v560, %v674
    %v679 = vxor.u32 %v677, 2147483648
    %v680 = vxor.u32 %v678, 2147483648
    %v681 = vmul.f32 %v679, 1.442695
    %v682 = vpow.pop %v681
    %v683 = vmul.f32 %v680, 1.442695
    %v684 = vpow.pop %v683
    %v685 = vadd.f32 %v682, 1.0
    %v686 = vadd.f32 %v684, 1.0
    %v687 = vrcp.pop %v685
    %v688 = vmul.f32 1.0, %v687
    %v689 = vrcp.pop %v686
    %v690 = vmul.f32 1.0, %v689
    %691 = vrot.lane.b32.xlu0 %v674, 64
    %v692 = vpop.permute.xlu0 %691
    %v694 = vmul.f32 %v688, %v692
    %696 = vrot.lane.b32.xlu0 %v694, 64
    %v697 = vpop.permute.xlu0 %696
    %v699 = vadd.f32 %v560, %v697
    %v700 = vtanh.pop %v699
    %v701 = vsub.f32 1.0, %v690
    %703 = vrot.lane.b32.xlu0 %v700, 96
    %v704 = vpop.permute.xlu0 %703
    %v706 = vmul.f32 %v701, %v704
    %v707 = vmul.f32 %v690, 0.0
    %v708 = vadd.f32 %v706, %v707
    %710 = vrot.lane.b32.xlu0 %v671, 96
    %v711 = vpop.permute.xlu0 %710
    %v714 = vrot.slane %v708, 3
    %715 = vrot.lane.b32.xlu0 %v714, 32
    %v716 = vpop.permute.xlu0 %715
    %v718 = vsel %vm188, %v711, %v716
    %v720 = vsel %vm201, %v718, 0
    %722 = vmatprep.subr.mxu0 %v67
    %723 = vmatpush1.msra.mxu0 %v66
    %724 = vmatprep.subr.mxu0 %v69
    %725 = vmatpush1.msra.mxu0 %v68
    %726 = vmatprep.subr.mxu0 %v71
    %727 = vmatpush1.msra.mxu0 %v70
    %728 = vmatprep.subr.mxu0 %v73
    %729 = vmatpush1.msra.mxu0 %v72
    %730 = vmatprep.subr.mxu0 %v75
    %731 = vmatpush1.msra.mxu0 %v74
    %732 = vmatprep.subr.mxu0 %v77
    %733 = vmatpush1.msra.mxu0 %v76
    %734 = vmatprep.subr.mxu0 %v79
    %735 = vmatpush1.msra.mxu0 %v78
    %736 = vmatprep.subr.mxu0 %v81
    %737 = vmatpush1.msra.mxu0 %v80
    %738 = vmatprep.subr.mxu0 0.0
    %739 = vmatpush1.msra.mxu0 0.0
    %740 = vmatprep.subr.mxu0 0.0
    %741 = vmatpush1.msra.mxu0 0.0
    %742 = vmatprep.subr.mxu0 0.0
    %743 = vmatpush1.msra.mxu0 0.0
    %744 = vmatprep.subr.mxu0 0.0
    %745 = vmatpush1.msra.mxu0 0.0
    %746 = vmatprep.subr.mxu0 0.0
    %747 = vmatpush1.msra.mxu0 0.0
    %748 = vmatprep.subr.mxu0 0.0
    %749 = vmatpush1.msra.mxu0 0.0
    %750 = vmatprep.subr.mxu0 0.0
    %751 = vmatpush1.msra.mxu0 0.0
    %752 = vmatprep.subr.mxu0 0.0
    %753 = vmatpush1.msra.mxu0 0.0
    %754 = vmatprep.subr.mxu0 0.0
    %755 = vmatpush1.msra.mxu0 0.0
    %756 = vmatprep.subr.mxu0 0.0
    %757 = vmatpush1.msra.mxu0 0.0
    %758 = vmatprep.subr.mxu0 0.0
    %759 = vmatpush1.msra.mxu0 0.0
    %760 = vmatprep.subr.mxu0 0.0
    %761 = vmatpush1.msra.mxu0 0.0
    %762 = vmatprep.subr.mxu0 0.0
    %763 = vmatpush1.msra.mxu0 0.0
    %764 = vmatprep.subr.mxu0 0.0
    %765 = vmatpush1.msra.mxu0 0.0
    %766 = vmatprep.subr.mxu0 0.0
    %767 = vmatpush1.msra.mxu0 0.0
    %768 = vmatprep.subr.mxu0 0.0
    %769 = vmatpush1.msra.mxu0 0.0
    %770 = vmatprep.subr.mxu0 0.0
    %771 = vmatpush1.msra.mxu0 0.0
    %772 = vmatprep.subr.mxu0 0.0
    %773 = vmatpush1.msra.mxu0 0.0
    %774 = vmatprep.subr.mxu0 0.0
    %775 = vmatpush1.msra.mxu0 0.0
    %776 = vmatprep.subr.mxu0 0.0
    %777 = vmatpush1.msra.mxu0 0.0
    %778 = vmatprep.subr.mxu0 0.0
    %779 = vmatpush1.msra.mxu0 0.0
    %780 = vmatprep.subr.mxu0 0.0
    %781 = vmatpush1.msra.mxu0 0.0
    %782 = vmatprep.subr.mxu0 0.0
    %783 = vmatpush1.msra.mxu0 0.0
    %784 = vmatprep.subr.mxu0 0.0
    %785 = vmatpush1.msra.mxu0 0.0
    %786 = vmatprep.mubr.f32.mxu0 0.0
    %787 = vmatmul.mubr.f32.gmra.mrb[0].mxu0 %v720
    %v788 = vpop.f32.mrb[0].mxu0
    %v789 = vadd.f32 %v565, %v788
    %v790 = vpop.f32.mrb[0].mxu0
    %v791 = vadd.f32 %v569, %v790
    %792 = vdwg.mxu0
    %v794 = vrot.slane %v789, 5
    %v796 = vadd.f32 %v559, %v794
    %v797 = vxor.u32 %v796, 2147483648
    %v798 = vmul.f32 %v797, 1.442695
    %v799 = vpow.pop %v798
    %v800 = vadd.f32 %v799, 1.0
    %v801 = vrcp.pop %v800
    %v802 = vmul.f32 1.0, %v801
    %803 = vrot.lane.b32.xlu0 %v794, 64
    %v804 = vpop.permute.xlu0 %803
    %v806 = vmul.f32 %v802, %v804
    %808 = vrot.lane.b32.xlu0 %v806, 64
    %v809 = vpop.permute.xlu0 %808
    %v811 = vadd.f32 %v559, %v809
    %v812 = vtanh.pop %v811
    %v813 = vsub.f32 1.0, %v802
    %815 = vrot.lane.b32.xlu0 %v812, 96
    %v816 = vpop.permute.xlu0 %815
    %v818 = vmul.f32 %v813, %v816
    %v819 = vrot.slane %v671, 5
    %v821 = vmul.f32 %v802, %v819
    %v822 = vadd.f32 %v818, %v821
    %v823 = vadd.f32 %v559, %v789
    %v824 = vadd.f32 %v560, %v791
    %v825 = vxor.u32 %v823, 2147483648
    %v826 = vxor.u32 %v824, 2147483648
    %v827 = vmul.f32 %v825, 1.442695
    %v828 = vpow.pop %v827
    %v829 = vmul.f32 %v826, 1.442695
    %v830 = vpow.pop %v829
    %v831 = vadd.f32 %v828, 1.0
    %v832 = vadd.f32 %v830, 1.0
    %v833 = vrcp.pop %v831
    %v834 = vmul.f32 1.0, %v833
    %v835 = vrcp.pop %v832
    %v836 = vmul.f32 1.0, %v835
    %838 = vrot.lane.b32.xlu0 %v791, 64
    %v839 = vpop.permute.xlu0 %838
    %v841 = vmul.f32 %v834, %v839
    %843 = vrot.lane.b32.xlu0 %v841, 64
    %v844 = vpop.permute.xlu0 %843
    %v846 = vadd.f32 %v560, %v844
    %v847 = vtanh.pop %v846
    %v848 = vsub.f32 1.0, %v836
    %850 = vrot.lane.b32.xlu0 %v847, 96
    %v851 = vpop.permute.xlu0 %850
    %v853 = vmul.f32 %v848, %v851
    %v855 = vmul.f32 %v836, %v714
    %v856 = vadd.f32 %v853, %v855
    %v857 = vsel %vm462, %v671, %v822
    %v858 = vsel %vm462, %v856, %v708
    %860 = vrot.lane.b32.xlu0 %v857, 96
    %v861 = vpop.permute.xlu0 %860
    %864 = vrot.lane.b32.xlu0 %v858, 32
    %v865 = vpop.permute.xlu0 %864
    %v867 = vsel %vm188, %v861, %v865
    %v869 = vsel %vm201, %v867, 0
    %871 = vmatprep.subr.mxu0 0.0
    %872 = vmatpush1.msra.mxu0 %v88
    %873 = vmatprep.subr.mxu0 0.0
    %874 = vmatpush1.msra.mxu0 %v89
    %875 = vmatprep.subr.mxu0 0.0
    %876 = vmatpush1.msra.mxu0 %v90
    %877 = vmatprep.subr.mxu0 0.0
    %878 = vmatpush1.msra.mxu0 %v91
    %879 = vmatprep.subr.mxu0 0.0
    %880 = vmatpush1.msra.mxu0 %v92
    %881 = vmatprep.subr.mxu0 0.0
    %882 = vmatpush1.msra.mxu0 %v93
    %883 = vmatprep.subr.mxu0 0.0
    %884 = vmatpush1.msra.mxu0 %v94
    %885 = vmatprep.subr.mxu0 0.0
    %886 = vmatpush1.msra.mxu0 %v95
    %887 = vmatprep.subr.mxu0 0.0
    %888 = vmatpush1.msra.mxu0 0.0
    %889 = vmatprep.subr.mxu0 0.0
    %890 = vmatpush1.msra.mxu0 0.0
    %891 = vmatprep.subr.mxu0 0.0
    %892 = vmatpush1.msra.mxu0 0.0
    %893 = vmatprep.subr.mxu0 0.0
    %894 = vmatpush1.msra.mxu0 0.0
    %895 = vmatprep.subr.mxu0 0.0
    %896 = vmatpush1.msra.mxu0 0.0
    %897 = vmatprep.subr.mxu0 0.0
    %898 = vmatpush1.msra.mxu0 0.0
    %899 = vmatprep.subr.mxu0 0.0
    %900 = vmatpush1.msra.mxu0 0.0
    %901 = vmatprep.subr.mxu0 0.0
    %902 = vmatpush1.msra.mxu0 0.0
    %903 = vmatprep.subr.mxu0 0.0
    %904 = vmatpush1.msra.mxu0 0.0
    %905 = vmatprep.subr.mxu0 0.0
    %906 = vmatpush1.msra.mxu0 0.0
    %907 = vmatprep.subr.mxu0 0.0
    %908 = vmatpush1.msra.mxu0 0.0
    %909 = vmatprep.subr.mxu0 0.0
    %910 = vmatpush1.msra.mxu0 0.0
    %911 = vmatprep.subr.mxu0 0.0
    %912 = vmatpush1.msra.mxu0 0.0
    %913 = vmatprep.subr.mxu0 0.0
    %914 = vmatpush1.msra.mxu0 0.0
    %915 = vmatprep.subr.mxu0 0.0
    %916 = vmatpush1.msra.mxu0 0.0
    %917 = vmatprep.subr.mxu0 0.0
    %918 = vmatpush1.msra.mxu0 0.0
    %919 = vmatprep.subr.mxu0 0.0
    %920 = vmatpush1.msra.mxu0 0.0
    %921 = vmatprep.subr.mxu0 0.0
    %922 = vmatpush1.msra.mxu0 0.0
    %923 = vmatprep.subr.mxu0 0.0
    %924 = vmatpush1.msra.mxu0 0.0
    %925 = vmatprep.subr.mxu0 0.0
    %926 = vmatpush1.msra.mxu0 0.0
    %927 = vmatprep.subr.mxu0 0.0
    %928 = vmatpush1.msra.mxu0 0.0
    %929 = vmatprep.subr.mxu0 0.0
    %930 = vmatpush1.msra.mxu0 0.0
    %931 = vmatprep.subr.mxu0 0.0
    %932 = vmatpush1.msra.mxu0 0.0
    %933 = vmatprep.subr.mxu0 0.0
    %934 = vmatpush1.msra.mxu0 0.0
    %935 = vmatprep.mubr.f32.mxu0 0.0
    %936 = vmatmul.mubr.f32.gmra.mrb[0].mxu0 %v869
    %v937 = vpop.f32.mrb[0].mxu0
    %v938 = vadd.f32 %v104, %v937
    %v939 = vpop.f32.mrb[0].mxu0
    %940 = vdwg.mxu0
    %v941 = vadd.f32 %v938, %v33
    %v942 = vmul.f32 %v941, 100.0
    %v943 = vxor.u32 %v942, 2147483648
    %v944 = vmul.f32 %v943, 1.442695
    %v945 = vpow.pop %v944
    %v946 = vadd.f32 %v945, 1.0
    %v947 = vrcp.pop %v946
    %v948 = vmul.f32 1.0, %v947
    %v950 = vrot.slane %v948, 3
    %951 = vrot.lane.b32.xlu0 %v950, 1
    %v952 = vpop.permute.xlu0 %951
    %vm954 = vcmask 7168
    %v955 = vsel %vm954, %v948, %v952
    %956 = vrot.lane.b32.xlu0 %v383, 64
    %v957 = vpop.permute.xlu0 %956
    %958 = vrot.lane.b32.xlu0 %v383, 32
    %v959 = vpop.permute.xlu0 %958
    %v960 = vsel %vm188, %v957, 0
    %v962 = vsel %vm188, %v959, 0
    %964 = vmatprep.subr.mxu0 0.0
    %965 = vmatpush1.xpose.msra.mxu0 %v962
    %966 = vmatprep.subr.mxu0 0.0
    %967 = vmatpush1.xpose.msra.mxu0 0.0
    %968 = vmatprep.subr.mxu0 0.0
    %969 = vmatpush1.xpose.msra.mxu0 0.0
    %970 = vmatprep.subr.mxu0 0.0
    %971 = vmatpush1.xpose.msra.mxu0 0.0
    %972 = vmatprep.subr.mxu0 0.0
    %973 = vmatpush1.xpose.msra.mxu0 0.0
    %974 = vmatprep.subr.mxu0 0.0
    %975 = vmatpush1.xpose.msra.mxu0 0.0
    %976 = vmatprep.subr.mxu0 0.0
    %977 = vmatpush1.xpose.msra.mxu0 0.0
    %978 = vmatprep.subr.mxu0 0.0
    %979 = vmatpush1.xpose.msra.mxu0 0.0
    %980 = vmatprep.subr.mxu0 0.0
    %981 = vmatpush1.xpose.msra.mxu0 0.0
    %982 = vmatprep.subr.mxu0 0.0
    %983 = vmatpush1.xpose.msra.mxu0 0.0
    %984 = vmatprep.subr.mxu0 0.0
    %985 = vmatpush1.xpose.msra.mxu0 0.0
    %986 = vmatprep.subr.mxu0 0.0
    %987 = vmatpush1.xpose.msra.mxu0 0.0
    %988 = vmatprep.subr.mxu0 0.0
    %989 = vmatpush1.xpose.msra.mxu0 0.0
    %990 = vmatprep.subr.mxu0 0.0
    %991 = vmatpush1.xpose.msra.mxu0 0.0
    %992 = vmatprep.subr.mxu0 0.0
    %993 = vmatpush1.xpose.msra.mxu0 0.0
    %994 = vmatprep.subr.mxu0 0.0
    %995 = vmatpush1.xpose.msra.mxu0 0.0
    %996 = vmatprep.subr.mxu0 0.0
    %997 = vmatpush1.xpose.msra.mxu0 0.0
    %998 = vmatprep.subr.mxu0 0.0
    %999 = vmatpush1.xpose.msra.mxu0 0.0
    %1000 = vmatprep.subr.mxu0 0.0
    %1001 = vmatpush1.xpose.msra.mxu0 0.0
    %1002 = vmatprep.subr.mxu0 0.0
    %1003 = vmatpush1.xpose.msra.mxu0 0.0
    %1004 = vmatprep.subr.mxu0 0.0
    %1005 = vmatpush1.xpose.msra.mxu0 0.0
    %1006 = vmatprep.subr.mxu0 0.0
    %1007 = vmatpush1.xpose.msra.mxu0 0.0
    %1008 = vmatprep.subr.mxu0 0.0
    %1009 = vmatpush1.xpose.msra.mxu0 0.0
    %1010 = vmatprep.subr.mxu0 0.0
    %1011 = vmatpush1.xpose.msra.mxu0 0.0
    %1012 = vmatprep.subr.mxu0 0.0
    %1013 = vmatpush1.xpose.msra.mxu0 0.0
    %1014 = vmatprep.subr.mxu0 0.0
    %1015 = vmatpush1.xpose.msra.mxu0 0.0
    %1016 = vmatprep.subr.mxu0 0.0
    %1017 = vmatpush1.xpose.msra.mxu0 0.0
    %1018 = vmatprep.subr.mxu0 0.0
    %1019 = vmatpush1.xpose.msra.mxu0 0.0
    %1020 = vmatprep.subr.mxu0 0.0
    %1021 = vmatpush1.xpose.msra.mxu0 0.0
    %1022 = vmatprep.subr.mxu0 0.0
    %1023 = vmatpush1.xpose.msra.mxu0 0.0
    %1024 = vmatprep.subr.mxu0 0.0
    %1025 = vmatpush1.xpose.msra.mxu0 0.0
    %1026 = vmatprep.subr.mxu0 0.0
    %1027 = vmatpush1.xpose.msra.mxu0 0.0
    %1028 = vmatprep.mubr.f32.mxu0 0.0
    %1029 = vmatmul.mubr.f32.gmra.mrb[0].mxu0 %v960
    %v1030 = vpop.f32.mrb[0].mxu0
    %v1031 = vadd.f32 0.0, %v1030
    %v1032 = vpop.f32.mrb[0].mxu0
    %1033 = vdwg.mxu0
    %v1034 = vlaneseq
    %v1035 = vshrl.u32 %v1034, 7
    %v1036 = vlaneseq
    %v1037 = vand.u32 %v1036, 127
    %vm1038 = vcmp.eq.s32.totalorder %v1035, %v1037
    %v1039 = vsel %vm1038, -1e+30, %v1031
    %vm1040 = vcmask 18432
    %v1041 = vsel %vm1040, %v1039, -inf
    %1042 = vmax.xlane.f32.xlu0 %v1041
    %v1043 = vpop.xlane.xlu0 %1042
    %v1044 = vsub.f32 %v1039, %v1043
    %v1045 = vmul.f32 %v1044, 1.442695
    %v1046 = vpow.pop %v1045
    %v1047 = vsel %vm1040, %v1046, 0.0
    %1048 = vadd.xlane.f32.xlu0 %v1047
    %v1049 = vpop.xlane.xlu0 %1048
    %v1050 = vrcp.pop %v1049
    %v1051 = vmul.f32 %v1046, %v1050
    %v1052 = vmul.f32 %v1051, %v96
    %v1053 = vsel %vm1040, %v1052, 0.0
    %1054 = vadd.xlane.f32.xlu0 %v1053
    %v1055 = vpop.xlane.xlu0 %1054
    %v1056 = vrot.slane %v96, 3
    %v1058 = vmul.f32 %v1051, %v1056
    %v1059 = vsel %vm1040, %v1058, 0.0
    %1060 = vadd.xlane.f32.xlu0 %v1059
    %v1061 = vpop.xlane.xlu0 %1060
    %v1062 = vsel %vm954, %v1055, %v1061
    %v1063 = vmul.f32 %v1062, %v955
    %v1064 = vrot.slane %v31, 1
    %v1066 = vsub.f32 %v31, %v1064
    %v1067 = vrot.slane %v31, 2
    %v1069 = vsub.f32 %v31, %v1067
    %v1071 = vrot.slane %v1069, 7
    %v1074 = vrot.slane %v1066, 7
    %vm1076 = vcmask 1040384
    %v1077 = vsel %vm1076, %v1066, %v1071
    %v1078 = vsel %vm109, %v1077, %v1074
    %v1079 = vmul.f32 %v1078, %v1078
    %vm1080 = vcmask 337920
    %v1081 = vsel %vm1080, %v1079, 0.0
    %1082 = vadd.xlane.f32.xlu0 %v1081
    %v1083 = vpop.xlane.xlu0 %1082
    %v1085 = vrot.slane %v1083, 1
    %v1087 = vsel %vm954, %v1083, %v1085
    %v1088 = vrot.slane %v1083, 2
    %v1090 = vsel %vm954, %v1083, %v1088
    %v1092 = vrot.slane %v1090, 7
    %v1095 = vrot.slane %v1087, 7
    %v1097 = vsel %vm1076, %v1087, %v1092
    %v1098 = vsel %vm109, %v1097, %v1095
    %1101 = vrot.lane.b32.xlu0 %v1063, 32
    %v1102 = vpop.permute.xlu0 %1101
    %1105 = vrot.lane.b32.xlu0 %v1098, 34
    %v1106 = vpop.permute.xlu0 %1105
    %v1108 = vsel %vm188, %v311, %v1102
    %vm1109 = vcmask 277504
    %v1110 = vsel %vm1109, %v1108, %v1106
    %vm1111 = vcmask 293888
    %v1112 = vsel %vm1111, %v1110, 0.0
    %v1113 = vsel %vm462, %v1112, 0.0
    %1114 = vst [vmem:[%s4] sm:$0xff] %v1113
    // Predicated region
    $region22: #{g2a_forward.1} parent=1 // pred_check
      _
    $region23: #{g2a_forward.1} parent=1 // pred_check_branch
      %1116 = sbr.rel (0) target = $region25
    $region24: #{g2a_forward.1} parent=1 // pred_region
      _
    $region25: #{g2a_forward.1} parent=1 // pred_fallthru
      _
    // Predicated region
    $region26: #{g2a_forward.1} parent=1 // pred_check
      _
    $region27: #{g2a_forward.1} parent=1 // pred_check_branch
      %1118 = sbr.rel (0) target = $region29
    $region28: #{g2a_forward.1} parent=1 // pred_region
      _
    $region29: #{g2a_forward.1} parent=1 // pred_fallthru
      _
    %1119 = vsyncpa [#allocation3], 1

</llo_original>
